<compile_context>
chip_gen: v7x
topology: tpu7x:2x2x1
jax: 0.10.0
libtpu: 0.0.40
codegen_flags: <defaults>
</compile_context>

<pallas_src>
import functools

import jax
import jax.numpy as jnp
from jax.experimental import pallas as pl
from jax.experimental.pallas import tpu as pltpu


def _naive_gate_kernel(x_ref, w_ref, b_ref, gates_ref, *, top_k):
    """One row-tile of tokens: logits -> top-k -> softmax -> dense scatter."""
    # --- gating linear layer (MXU, bf16 operands, f32 accumulation) ---
    logits = jnp.dot(x_ref[...], w_ref[...],
                     preferred_element_type=jnp.float32) + b_ref[...]
    tn, num_e = logits.shape
    ids = jax.lax.broadcasted_iota(jnp.int32, (tn, num_e), 1)

    # --- top-1 (ties -> lowest index, matching torch.sort / lax.top_k) ---
    max1 = jnp.max(logits, axis=-1, keepdims=True)
    idx1 = jnp.min(jnp.where(logits == max1, ids, num_e), axis=-1, keepdims=True)

    if top_k == 1:
        gates = jnp.where(ids == idx1, 1.0, 0.0)
    else:
        # --- top-2 ---
        masked = jnp.where(ids == idx1, -jnp.inf, logits)
        max2 = jnp.max(masked, axis=-1, keepdims=True)
        idx2 = jnp.min(jnp.where(masked == max2, ids, num_e),
                       axis=-1, keepdims=True)
        # softmax over the two selected logits; exp(max1 - max1) == 1.0 exactly.
        e2 = jnp.exp(max2 - max1)                       # <= 1, EUP
        inv = pl.reciprocal(1.0 + e2, approx=False)
        w1 = inv                                        # = 1 / (1 + e2)
        w2 = e2 * inv
        # dense scatter of the two gate weights
        gates = jnp.where(ids == idx1, w1, 0.0) + jnp.where(ids == idx2, w2, 0.0)

    gates_ref[...] = gates.astype(jnp.float32)


def prepare_gate_params(weight, bias, *, compute_dtype=jnp.bfloat16):
    """One-time preparation of the gate parameters for the kernel.

    weight: [tot_expert, d_model] (PyTorch nn.Linear layout)
    bias:   [tot_expert]
    Returns (w_t_pad [d_model, e_pad] compute_dtype, b_pad [1, e_pad] f32).
    Padded expert columns get a huge negative bias so they are never selected.
    """
    tot_expert, d_model = weight.shape
    e_pad = ((tot_expert + 127) // 128) * 128           # lane-dense expert dim
    w_t_pad = jnp.zeros((d_model, e_pad), dtype=compute_dtype)
    w_t_pad = w_t_pad.at[:, :tot_expert].set(weight.T.astype(compute_dtype))
    b_pad = jnp.full((1, e_pad), -1e30, dtype=jnp.float32)
    b_pad = b_pad.at[0, :tot_expert].set(bias.astype(jnp.float32))
    return w_t_pad, b_pad


def naive_gate_forward(inp, w_t_pad, b_pad, *, tot_expert, top_k=2,
                       row_tile=256):
    """
    inp:      [N, d_model] (any float dtype; cast to w_t_pad.dtype for the MXU)
    w_t_pad:  [d_model, e_pad]  (from prepare_gate_params)
    b_pad:    [1, e_pad] float32
    returns dense gates [N, tot_expert] float32 (softmaxed top-k, zeros elsewhere)
    """
    assert top_k in (1, 2), "NaiveGate kernel supports top_k in {1, 2}"
    n, d_model = inp.shape
    d_model_w, e_pad = w_t_pad.shape
    assert d_model == d_model_w
    assert tot_expert <= e_pad

    compute_dtype = w_t_pad.dtype
    x = inp.astype(compute_dtype)

    # Arbitrary N: pad rows up to a multiple of row_tile, slice afterwards.
    grid_m = pl.cdiv(n, row_tile)
    n_pad = grid_m * row_tile
    if n_pad != n:
        x = jnp.pad(x, ((0, n_pad - n), (0, 0)))

    # Explicit VMEM budget: double-buffered x/out tiles + resident (but still
    # double-buffered by default) weight/bias blocks, with generous margin.
    # Min 16 MiB (v5e scoped default), max 64 MiB (v7x physical VMEM).
    bpe = jnp.dtype(compute_dtype).itemsize
    x_tile = row_tile * d_model * bpe
    w_blk = d_model * e_pad * bpe
    b_blk = e_pad * 4
    o_tile = row_tile * e_pad * 4
    vmem_bytes = int(min(max(4 * (x_tile + w_blk + b_blk + o_tile), 16 << 20),
                         64 << 20))
    # NOTE: for very large d_model * e_pad, the resident weight block could be
    # single-buffered (pipeline_mode=pl.Buffered(1)) to free VMEM headroom for
    # an even larger row_tile; omitted here to keep the build maximally robust.

    kernel = functools.partial(_naive_gate_kernel, top_k=top_k)

    gates_pad = pl.pallas_call(
        kernel,
        out_shape=jax.ShapeDtypeStruct((n_pad, e_pad), jnp.float32),
        grid_spec=pltpu.PrefetchScalarGridSpec(
            num_scalar_prefetch=0,
            grid=(grid_m,),
            in_specs=[
                pl.BlockSpec((row_tile, d_model), lambda i: (i, 0)),
                pl.BlockSpec((d_model, e_pad), lambda i: (0, 0)),
                pl.BlockSpec((1, e_pad), lambda i: (0, 0)),
            ],
            out_specs=pl.BlockSpec((row_tile, e_pad), lambda i: (i, 0)),
        ),
        compiler_params=pltpu.CompilerParams(
            dimension_semantics=("parallel",),
            vmem_limit_bytes=vmem_bytes),
    )(x, w_t_pad, b_pad)

    return gates_pad[:n, :tot_expert]


def naive_gate_reference(inp, weight, bias, top_k=2,
                         compute_dtype=jnp.bfloat16):
    """Pure-JAX reference matching the PyTorch forward (same MXU dtype path)."""
    logits = jnp.dot(inp.astype(compute_dtype), weight.T.astype(compute_dtype),
                     preferred_element_type=jnp.float32)
    logits = logits + bias.astype(jnp.float32)
    vals, idxs = jax.lax.top_k(logits, top_k)
    if top_k == 1:
        gate_w = jnp.ones_like(vals, dtype=jnp.float32)
    else:
        gate_w = jax.nn.softmax(vals, axis=-1)
    gates = jnp.zeros_like(logits, dtype=jnp.float32)
    rows = jnp.arange(inp.shape[0])[:, None]
    gates = gates.at[rows, idxs].set(gate_w)
    return gates


if __name__ == "__main__":
    # Small shapes consistent with NaiveGate(d_model, num_expert, world_size).
    # N_TOKENS deliberately not a multiple of row_tile (exercises cdiv padding)
    # and large enough that the grid has 2 steps (v7x dual-TensorCore sharding).
    N_TOKENS = 384
    D_MODEL = 32
    NUM_EXPERT = 4
    WORLD_SIZE = 1
    TOT_EXPERT = NUM_EXPERT * WORLD_SIZE
    TOP_K = 2

    key = jax.random.PRNGKey(0)
    k_x, k_w, k_b = jax.random.split(key, 3)

    x = jax.random.normal(k_x, (N_TOKENS, D_MODEL), dtype=jnp.float32)
    # Deterministic nn.Linear-style init (uniform in +/- 1/sqrt(fan_in))
    bound = 1.0 / (D_MODEL ** 0.5)
    w = jax.random.uniform(k_w, (TOT_EXPERT, D_MODEL),
                           minval=-bound, maxval=bound, dtype=jnp.float32)
    b = jax.random.uniform(k_b, (TOT_EXPERT,),
                           minval=-bound, maxval=bound, dtype=jnp.float32)

    w_t_pad, b_pad = prepare_gate_params(w, b)          # one-time prep
    gates = naive_gate_forward(x, w_t_pad, b_pad,
                               tot_expert=TOT_EXPERT, top_k=TOP_K)
    gates = jax.block_until_ready(gates)

    # shift_ratio side-effect from the PyTorch module (host scalar, not part of
    # the returned tensor): sum(sorted_idx != 0) / N == tot_expert - 1.
    shift_ratio = float(TOT_EXPERT - 1)
    # TODO(synk): self._print branch saves indices to disk and exits — not applicable.

    ref = naive_gate_reference(x, w, b, top_k=TOP_K)
    assert gates.shape == (N_TOKENS, TOT_EXPERT)
    assert gates.dtype == jnp.float32
    assert jnp.allclose(gates, ref, atol=1e-4, rtol=1e-4), (gates, ref)
    # Each row's gate weights sum to 1 (softmax over the selected top-k).
    assert jnp.allclose(gates.sum(-1), 1.0, atol=1e-4)
    del shift_ratio

    print("KERNEL_OK")
</pallas_src>

<mosaic_0001>
module attributes {stable_mosaic.version = 11 : i64} {
  func.func @_naive_gate_kernel(%arg0: i32, %arg1: memref<256x32xbf16, #tpu.memory_space<vmem>>, %arg2: memref<32x128xbf16, #tpu.memory_space<vmem>>, %arg3: memref<1x128xf32, #tpu.memory_space<vmem>>, %arg4: memref<256x128xf32, #tpu.memory_space<vmem>>) attributes {dimension_semantics = [#tpu.dimension_semantics<parallel>], iteration_bounds = array<i64: 2>, scalar_prefetch = 0 : i64, scratch_operands = 0 : i64, tpu.core_type = #tpu.core_type<tc>, window_params = [{transform_indices = @transform_0, window_bounds = array<i64: 256, 32>}, {pipeline_mode = #tpu.pipeline_mode<synchronous>, transform_indices = @transform_1, window_bounds = array<i64: 32, 128>}, {pipeline_mode = #tpu.pipeline_mode<synchronous>, transform_indices = @transform_2, window_bounds = array<i64: 1, 128>}, {transform_indices = @transform_3, window_bounds = array<i64: 256, 128>}]} {
    %c0 = arith.constant 0 : index
    %c0_0 = arith.constant 0 : index
    %0 = vector.load %arg1[%c0, %c0_0] : memref<256x32xbf16, #tpu.memory_space<vmem>>, vector<256x32xbf16>
    %c0_1 = arith.constant 0 : index
    %c0_2 = arith.constant 0 : index
    %1 = vector.load %arg2[%c0_1, %c0_2] : memref<32x128xbf16, #tpu.memory_space<vmem>>, vector<32x128xbf16>
    %cst = arith.constant dense<0.000000e+00> : vector<256x128xf32>
    %2 = tpu.matmul %0, %1, %cst {dimension_numbers = #tpu.dot_dimension_numbers<[1], [0], [0], [1], [0, 0, 1, 1], [], []>} : vector<256x32xbf16>, vector<32x128xbf16>, vector<256x128xf32> -> vector<256x128xf32>
    %c0_3 = arith.constant 0 : index
    %c0_4 = arith.constant 0 : index
    %3 = vector.load %arg3[%c0_3, %c0_4] : memref<1x128xf32, #tpu.memory_space<vmem>>, vector<1x128xf32>
    %4 = vector.broadcast %3 : vector<1x128xf32> to vector<256x128xf32>
    %5 = arith.addf %2, %4 : vector<256x128xf32>
    %6 = tpu.iota {dimensions = array<i32: 1>} : vector<256x128xi32>
    %cst_5 = arith.constant dense<0xFF800000> : vector<256xf32>
    %7 = vector.multi_reduction <maximumf>, %5, %cst_5 [1] : vector<256x128xf32> to vector<256xf32>
    %8 = vector.shape_cast %7 : vector<256xf32> to vector<256x1xf32>
    %9 = vector.broadcast %8 : vector<256x1xf32> to vector<256x128xf32>
    %10 = arith.cmpf oeq, %5, %9 : vector<256x128xf32>
    %c128_i32 = arith.constant 128 : i32
    %11 = vector.broadcast %c128_i32 : i32 to vector<256x128xi32>
    %12 = arith.select %10, %6, %11 : vector<256x128xi1>, vector<256x128xi32>
    %cst_6 = arith.constant dense<2147483647> : vector<256xi32>
    %13 = vector.multi_reduction <minsi>, %12, %cst_6 [1] : vector<256x128xi32> to vector<256xi32>
    %14 = vector.shape_cast %13 : vector<256xi32> to vector<256x1xi32>
    %15 = vector.broadcast %14 : vector<256x1xi32> to vector<256x128xi32>
    %16 = arith.cmpi eq, %6, %15 : vector<256x128xi32>
    %cst_7 = arith.constant 0xFF800000 : f32
    %17 = vector.broadcast %cst_7 : f32 to vector<256x128xf32>
    %18 = arith.select %16, %17, %5 : vector<256x128xi1>, vector<256x128xf32>
    %cst_8 = arith.constant dense<0xFF800000> : vector<256xf32>
    %19 = vector.multi_reduction <maximumf>, %18, %cst_8 [1] : vector<256x128xf32> to vector<256xf32>
    %20 = vector.shape_cast %19 : vector<256xf32> to vector<256x1xf32>
    %21 = vector.broadcast %20 : vector<256x1xf32> to vector<256x128xf32>
    %22 = arith.cmpf oeq, %18, %21 : vector<256x128xf32>
    %c128_i32_9 = arith.constant 128 : i32
    %23 = vector.broadcast %c128_i32_9 : i32 to vector<256x128xi32>
    %24 = arith.select %22, %6, %23 : vector<256x128xi1>, vector<256x128xi32>
    %cst_10 = arith.constant dense<2147483647> : vector<256xi32>
    %25 = vector.multi_reduction <minsi>, %24, %cst_10 [1] : vector<256x128xi32> to vector<256xi32>
    %26 = vector.shape_cast %25 : vector<256xi32> to vector<256x1xi32>
    %27 = arith.subf %20, %8 : vector<256x1xf32>
    %28 = math.exp %27 : vector<256x1xf32>
    %cst_11 = arith.constant 1.000000e+00 : f32
    %29 = vector.broadcast %cst_11 : f32 to vector<256x1xf32>
    %30 = arith.addf %29, %28 : vector<256x1xf32>
    %31 = tpu.reciprocal %30 : vector<256x1xf32> -> vector<256x1xf32>
    %32 = arith.mulf %28, %31 : vector<256x1xf32>
    %33 = vector.broadcast %14 : vector<256x1xi32> to vector<256x128xi32>
    %34 = arith.cmpi eq, %6, %33 : vector<256x128xi32>
    %cst_12 = arith.constant 0.000000e+00 : f32
    %35 = vector.shape_cast %31 : vector<256x1xf32> to vector<256x1xf32>
    %36 = vector.broadcast %35 : vector<256x1xf32> to vector<256x128xf32>
    %37 = vector.broadcast %cst_12 : f32 to vector<256x128xf32>
    %38 = arith.select %34, %36, %37 : vector<256x128xi1>, vector<256x128xf32>
    %39 = vector.broadcast %26 : vector<256x1xi32> to vector<256x128xi32>
    %40 = arith.cmpi eq, %6, %39 : vector<256x128xi32>
    %cst_13 = arith.constant 0.000000e+00 : f32
    %41 = vector.shape_cast %32 : vector<256x1xf32> to vector<256x1xf32>
    %42 = vector.broadcast %41 : vector<256x1xf32> to vector<256x128xf32>
    %43 = vector.broadcast %cst_13 : f32 to vector<256x128xf32>
    %44 = arith.select %40, %42, %43 : vector<256x128xi1>, vector<256x128xf32>
    %45 = arith.addf %38, %44 : vector<256x128xf32>
    %c0_14 = arith.constant 0 : index
    %c0_15 = arith.constant 0 : index
    %46 = vector.load %arg4[%c0_14, %c0_15] : memref<256x128xf32, #tpu.memory_space<vmem>>, vector<256x128xf32>
    tpu.vector_store %arg4[%c0_14, %c0_15], %45 {strides = array<i32>} : memref<256x128xf32, #tpu.memory_space<vmem>>, vector<256x128xf32>,
    return
  }
  func.func @transform_0(%arg0: i32) -> (i32, i32) {
    %c0_i32 = arith.constant 0 : i32
    %c0_i32_0 = arith.constant 0 : i32
    return %arg0, %c0_i32 : i32, i32
  }
  func.func @transform_1(%arg0: i32) -> (i32, i32) {
    %c0_i32 = arith.constant 0 : i32
    %c0_i32_0 = arith.constant 0 : i32
    %c0_i32_1 = arith.constant 0 : i32
    return %c0_i32, %c0_i32_0 : i32, i32
  }
  func.func @transform_2(%arg0: i32) -> (i32, i32) {
    %c0_i32 = arith.constant 0 : i32
    %c0_i32_0 = arith.constant 0 : i32
    %c0_i32_1 = arith.constant 0 : i32
    return %c0_i32, %c0_i32_0 : i32, i32
  }
  func.func @transform_3(%arg0: i32) -> (i32, i32) {
    %c0_i32 = arith.constant 0 : i32
    %c0_i32_0 = arith.constant 0 : i32
    return %arg0, %c0_i32 : i32, i32
  }
}

</mosaic_0001>

<llo_original>
// kernel: tpu_custom_call.1
$region0: #{tpu_custom_call.1}
  #allocation0 [shape = 'u32[]', space=smem, size = 0x4, offset = 0x4, fixed_abs, tag = 'smem constant byte address 0x4 - core index']
  #allocation1 [shape = 'u32[144,128]{1,0:T(1,128)}', space=vmem, size = 0x12000, scoped, tag = 'internal scratch']
  %s0 = inlined_call_operand.vmem [shape: bf16[512,32], index: 0, kind: input, shape index: {}]
  %s1 = inlined_call_operand.vmem [shape: bf16[32,128], index: 1, kind: input, shape index: {}]
  %s2 = inlined_call_operand.vmem [shape: f32[1,128], index: 2, kind: input, shape index: {}]
  %s3 = inlined_call_operand.hbm [shape: f32[512,128], index: 3, kind: output, shape index: {}]
  %s4 = sld [smem:[#allocation0]]
  $region45: #{tpu_custom_call.1} parent=0
    _
  %s6 = ssub.s32 1, %s4
  %s7 = scalar_select 0, %s6, %s4
  $region1: #{tpu_custom_call.1} parent=0
    #allocation2 [shape = 'u8[262144]{0}', space=vmem, size = 0x40000, scoped, tag = 'output window, operand 0']
    #allocation3 [shape = 's32[2]{0}', space=sflag, size = 0x8, scoped, tag = 'scoped memory for tpu_custom_call.1']
    %8 = vsyncpa [#allocation3], 0
    %s9 = scalar_lea.sflag [#allocation3], 1
    %10 = vsyncpa %s9, 0
    loop: start=0, step=1, limit=4
    $region2: #{tpu_custom_call.1} parent=1 // loop_pre_header
      _
    $region3: #{tpu_custom_call.1} parent=1 // loop_header
      %s12 = sphi 0, %s16
      %p13 = scmp.ge.s32.totalorder %s12, 4
      %s22 = sphi 0, %s24
      %s25 = sphi 0, %s22
      %s26 = sphi 0, %s25
      %s42 = sphi 0, %s26
      %s46 = sphi 0, %s46
      %s48 = sphi 0, %s46
      %s49 = sphi 0, %s48
      %s63 = sphi 0, %s49
      %s67 = sphi 0, %s67
      %s69 = sphi 0, %s67
      %s70 = sphi 0, %s69
      %s84 = sphi 0, %s70
      %s90 = sphi 0, %s92
      %s93 = sphi 0, %s90
      %s94 = sphi 0, %s93
      %s110 = sphi 0, %s94
    $region4: #{tpu_custom_call.1} parent=1 // loop_header_branch
      %15 = sbr.rel (%p13) target = $region8
    $region5: #{tpu_custom_call.1} parent=1 // loop_body
      %s17 = ssub.s32 %s12, 1
      %s18 = ssub.s32 %s12, 2
      %s19 = sadd.s32 %s12, 1
      %s20 = ssub.s32 %s12, %s19
      %p21 = scmp.eq.s32.totalorder %s20, 0
      %s23 = sadd.s32 %s22, 1
      %s24 = scalar_select %p21, %s22, %s23
      %p27 = pneg %p21
      %p28 = scmp.eq.s32.totalorder %s12, 1
      %p29 = por %p27, %p28
      %p30 = scmp.ne.s32.totalorder %s22, %s25
      %p31 = scmp.eq.s32.totalorder %s12, 0
      %p32 = por %p30, %p31
      %p33 = scmp.ne.s32.totalorder %s22, %s25
      %p34 = scmp.eq.s32.totalorder %s17, 1
      %p35 = por %p33, %p34
      %p36 = scmp.ne.s32.totalorder %s25, %s26
      %p37 = scmp.eq.s32.totalorder %s17, 0
      %p38 = por %p36, %p37
      %p39 = scmp.ne.s32.totalorder %s25, %s26
      %p40 = scmp.eq.s32.totalorder %s18, 1
      %p41 = por %p39, %p40
      %p43 = scmp.ne.s32.totalorder %s26, %s42
      %p44 = scmp.eq.s32.totalorder %s18, 0
      %p45 = por %p43, %p44
      %s47 = sadd.s32 %s46, 1
      %p50 = scmp.eq.s32.totalorder %s12, 1
      %p51 = scmp.ne.s32.totalorder %s46, %s48
      %p52 = scmp.eq.s32.totalorder %s12, 0
      %p53 = por %p51, %p52
      %p54 = scmp.ne.s32.totalorder %s46, %s48
      %p55 = scmp.eq.s32.totalorder %s17, 1
      %p56 = por %p54, %p55
      %p57 = scmp.ne.s32.totalorder %s48, %s49
      %p58 = scmp.eq.s32.totalorder %s17, 0
      %p59 = por %p57, %p58
      %p60 = scmp.ne.s32.totalorder %s48, %s49
      %p61 = scmp.eq.s32.totalorder %s18, 1
      %p62 = por %p60, %p61
      %p64 = scmp.ne.s32.totalorder %s49, %s63
      %p65 = scmp.eq.s32.totalorder %s18, 0
      %p66 = por %p64, %p65
      %s68 = sadd.s32 %s67, 1
      %p71 = scmp.eq.s32.totalorder %s12, 1
      %p72 = scmp.ne.s32.totalorder %s67, %s69
      %p73 = scmp.eq.s32.totalorder %s12, 0
      %p74 = por %p72, %p73
      %p75 = scmp.ne.s32.totalorder %s67, %s69
      %p76 = scmp.eq.s32.totalorder %s17, 1
      %p77 = por %p75, %p76
      %p78 = scmp.ne.s32.totalorder %s69, %s70
      %p79 = scmp.eq.s32.totalorder %s17, 0
      %p80 = por %p78, %p79
      %p81 = scmp.ne.s32.totalorder %s69, %s70
      %p82 = scmp.eq.s32.totalorder %s18, 1
      %p83 = por %p81, %p82
      %p85 = scmp.ne.s32.totalorder %s70, %s84
      %p86 = scmp.eq.s32.totalorder %s18, 0
      %p87 = por %p85, %p86
      %s88 = ssub.s32 %s12, %s19
      %p89 = scmp.eq.s32.totalorder %s88, 0
      %s91 = sadd.s32 %s90, 1
      %s92 = scalar_select %p89, %s90, %s91
      %p95 = pneg %p89
      %p96 = scmp.eq.s32.totalorder %s12, 1
      %p97 = por %p95, %p96
      %p98 = scmp.ne.s32.totalorder %s90, %s93
      %p99 = scmp.eq.s32.totalorder %s12, 0
      %p100 = por %p98, %p99
      %p101 = scmp.ne.s32.totalorder %s90, %s93
      %p102 = scmp.eq.s32.totalorder %s17, 1
      %p103 = por %p101, %p102
      %p104 = scmp.ne.s32.totalorder %s93, %s94
      %p105 = scmp.eq.s32.totalorder %s17, 0
      %p106 = por %p104, %p105
      %p107 = scmp.ne.s32.totalorder %s93, %s94
      %p108 = scmp.eq.s32.totalorder %s18, 1
      %p109 = por %p107, %p108
      %p111 = scmp.ne.s32.totalorder %s94, %s110
      %p112 = scmp.eq.s32.totalorder %s18, 0
      %p113 = por %p111, %p112
      %p114 = scmp.le.s32.totalorder 1, %s12
      %p115 = scmp.lt.s32.totalorder %s12, 3
      %p116 = pnand %p114, %p115
      %p117 = pneg %p116
      // Predicated region
      $region9: #{tpu_custom_call.1} parent=5 // pred_check
        _
      $region10: #{tpu_custom_call.1} parent=5 // pred_check_branch
        %119 = sbr.rel (%p116) target = $region12
      $region11: #{tpu_custom_call.1} parent=5 // pred_region
        %s120 = ssub.s32 %s12, 1
        // Predicated region
        $region13: #{tpu_custom_call.1} parent=11 // pred_check
          %p121 = pneg %p59
        $region14: #{tpu_custom_call.1} parent=11 // pred_check_branch
          %123 = sbr.rel (%p121) target = $region16
        $region15: #{tpu_custom_call.1} parent=11 // pred_region
          _
        $region16: #{tpu_custom_call.1} parent=11 // pred_fallthru
          _
        // Predicated region
        $region17: #{tpu_custom_call.1} parent=11 // pred_check
          %p124 = pneg %p80
        $region18: #{tpu_custom_call.1} parent=11 // pred_check_branch
          %126 = sbr.rel (%p124) target = $region20
        $region19: #{tpu_custom_call.1} parent=11 // pred_region
          _
        $region20: #{tpu_custom_call.1} parent=11 // pred_fallthru
          _
      $region12: #{tpu_custom_call.1} parent=5 // pred_fallthru
        _
      %p127 = scmp.lt.s32.totalorder %s12, 2
      // Predicated region
      $region21: #{tpu_custom_call.1} parent=5 // pred_check
        %p128 = pneg %p127
      $region22: #{tpu_custom_call.1} parent=5 // pred_check_branch
        %130 = sbr.rel (%p128) target = $region24
      $region23: #{tpu_custom_call.1} parent=5 // pred_region
        // Predicated region
        $region25: #{tpu_custom_call.1} parent=23 // pred_check
          %p131 = pneg %p32
        $region26: #{tpu_custom_call.1} parent=23 // pred_check_branch
          %133 = sbr.rel (%p131) target = $region28
        $region27: #{tpu_custom_call.1} parent=23 // pred_region
          %s134 = smul.u32 32, %s12
          %p135 = scmp.lt.s32.totalorder %s134, 63
          %s136 = scalar_select %p135, %s134, 63
          %s137 = smul.addr %s136, 4
          %s138 = scalar_lea.vmem %s0, %s137
          %s139 = smul.u32 32, %s12
        $region28: #{tpu_custom_call.1} parent=23 // pred_fallthru
          _
      $region24: #{tpu_custom_call.1} parent=5 // pred_fallthru
        _
      %p140 = scmp.le.s32.totalorder 1, %s12
      %p141 = scmp.lt.s32.totalorder %s12, 3
      %p142 = pnand %p140, %p141
      %p143 = pneg %p142
      // Predicated region
      $region29: #{tpu_custom_call.1} parent=5 // pred_check
        _
      $region30: #{tpu_custom_call.1} parent=5 // pred_check_branch
        %145 = sbr.rel (%p142) target = $region32
      $region31: #{tpu_custom_call.1} parent=5 // pred_region
        %s146 = ssub.s32 %s12, 1
        %s147 = smul.u32 32, %s17
        %p148 = scmp.lt.s32.totalorder %s147, 63
        %s149 = scalar_select %p148, %s147, 63
        %s150 = smul.addr %s149, 4
        %s151 = scalar_lea.vmem %s0, %s150
        %p152 = pneg %p38
        %p153 = pneg %p35
        %p154 = pneg %p59
        %p155 = pneg %p56
        %p156 = pneg %p80
        %p157 = pneg %p77
        %p158 = pneg %p106
        %p159 = pneg %p103
        %s160 = sand.u32 %s93, 1
        %s161 = scalar_lea.sflag [#allocation3], %s160
        %s162 = sand.u32 %s93, 1
        %s163 = smul.addr %s162, 256
        %s164 = scalar_lea.vmem [#allocation2], %s163
        %s165 = smul.u32 32, %s17
        %p166 = scmp.lt.s32.totalorder %s165, 63
        %s167 = scalar_select %p166, %s165, 63
        %s168 = smul.addr %s167, 4
        %s169 = scalar_lea.vmem %s0, %s168
        %s170 = smul.u32 32, %s17
        %s171 = smul.u32 32, %s17
        %v173 = vld [vmem:[%s169] sm:$0xf]
        %v174 = vld [vmem:[%s169 + $0x4] sm:$0xf]
        %v175 = vld [vmem:[%s169 + $0x8] sm:$0xf]
        %v176 = vld [vmem:[%s169 + $0xc] sm:$0xf]
        %v177 = vld [vmem:[%s169 + $0x10] sm:$0xf]
        %v178 = vld [vmem:[%s169 + $0x14] sm:$0xf]
        %v179 = vld [vmem:[%s169 + $0x18] sm:$0xf]
        %v180 = vld [vmem:[%s169 + $0x1c] sm:$0xf]
        %v181 = vld [vmem:[%s169 + $0x20] sm:$0xf]
        %v182 = vld [vmem:[%s169 + $0x24] sm:$0xf]
        %v183 = vld [vmem:[%s169 + $0x28] sm:$0xf]
        %v184 = vld [vmem:[%s169 + $0x2c] sm:$0xf]
        %v185 = vld [vmem:[%s169 + $0x30] sm:$0xf]
        %v186 = vld [vmem:[%s169 + $0x34] sm:$0xf]
        %v187 = vld [vmem:[%s169 + $0x38] sm:$0xf]
        %v188 = vld [vmem:[%s169 + $0x3c] sm:$0xf]
        %v189 = vld [vmem:[%s169 + $0x40] sm:$0xf]
        %v190 = vld [vmem:[%s169 + $0x44] sm:$0xf]
        %v191 = vld [vmem:[%s169 + $0x48] sm:$0xf]
        %v192 = vld [vmem:[%s169 + $0x4c] sm:$0xf]
        %v193 = vld [vmem:[%s169 + $0x50] sm:$0xf]
        %v194 = vld [vmem:[%s169 + $0x54] sm:$0xf]
        %v195 = vld [vmem:[%s169 + $0x58] sm:$0xf]
        %v196 = vld [vmem:[%s169 + $0x5c] sm:$0xf]
        %v197 = vld [vmem:[%s169 + $0x60] sm:$0xf]
        %v198 = vld [vmem:[%s169 + $0x64] sm:$0xf]
        %v199 = vld [vmem:[%s169 + $0x68] sm:$0xf]
        %v200 = vld [vmem:[%s169 + $0x6c] sm:$0xf]
        %v201 = vld [vmem:[%s169 + $0x70] sm:$0xf]
        %v202 = vld [vmem:[%s169 + $0x74] sm:$0xf]
        %v203 = vld [vmem:[%s169 + $0x78] sm:$0xf]
        %v204 = vld [vmem:[%s169 + $0x7c] sm:$0xf]
        %v205 = vld [vmem:[%s1] sm:$0xf]
        %v206 = vld [vmem:[%s1 + $0x4] sm:$0xf]
        %v207 = vld [vmem:[%s1 + $0x8] sm:$0xf]
        %v208 = vld [vmem:[%s1 + $0xc] sm:$0xf]
        %v209 = vld [vmem:[%s2] sm:$0x1]
        %v211 = vlaneseq
        %v212 = vshrl.u32 %v211, 7
        %v213 = vsub.s32 0, %v212
        %v214 = vrot.slane %v209, %v213
        %v248 = vunpack.c.l.b16 %v173
        %v249 = vunpack.c.l.b16 %v174
        %v250 = vunpack.c.l.b16 %v175
        %v251 = vunpack.c.l.b16 %v176
        %v252 = vunpack.c.l.b16 %v177
        %v253 = vunpack.c.l.b16 %v178
        %v254 = vunpack.c.l.b16 %v179
        %v255 = vunpack.c.l.b16 %v180
        %v256 = vunpack.c.l.b16 %v181
        %v257 = vunpack.c.l.b16 %v182
        %v258 = vunpack.c.l.b16 %v183
        %v259 = vunpack.c.l.b16 %v184
        %v260 = vunpack.c.l.b16 %v185
        %v261 = vunpack.c.l.b16 %v186
        %v262 = vunpack.c.l.b16 %v187
        %v263 = vunpack.c.l.b16 %v188
        %v264 = vunpack.c.l.b16 %v189
        %v265 = vunpack.c.l.b16 %v190
        %v266 = vunpack.c.l.b16 %v191
        %v267 = vunpack.c.l.b16 %v192
        %v268 = vunpack.c.l.b16 %v193
        %v269 = vunpack.c.l.b16 %v194
        %v270 = vunpack.c.l.b16 %v195
        %v271 = vunpack.c.l.b16 %v196
        %v272 = vunpack.c.l.b16 %v197
        %v273 = vunpack.c.l.b16 %v198
        %v274 = vunpack.c.l.b16 %v199
        %v275 = vunpack.c.l.b16 %v200
        %v276 = vunpack.c.l.b16 %v201
        %v277 = vunpack.c.l.b16 %v202
        %v278 = vunpack.c.l.b16 %v203
        %v279 = vunpack.c.l.b16 %v204
        %v280 = vpack.c.b16 %v249, %v248
        %v281 = vpack.c.b16 %v251, %v250
        %v282 = vpack.c.b16 %v253, %v252
        %v283 = vpack.c.b16 %v255, %v254
        %v284 = vpack.c.b16 %v257, %v256
        %v285 = vpack.c.b16 %v259, %v258
        %v286 = vpack.c.b16 %v261, %v260
        %v287 = vpack.c.b16 %v263, %v262
        %v288 = vpack.c.b16 %v265, %v264
        %v289 = vpack.c.b16 %v267, %v266
        %v290 = vpack.c.b16 %v269, %v268
        %v291 = vpack.c.b16 %v271, %v270
        %v292 = vpack.c.b16 %v273, %v272
        %v293 = vpack.c.b16 %v275, %v274
        %v294 = vpack.c.b16 %v277, %v276
        %v295 = vpack.c.b16 %v279, %v278
        %v300 = vunpack.c.l.b16 %v205
        %v301 = vunpack.c.l.b16 %v206
        %v302 = vunpack.c.l.b16 %v207
        %v303 = vunpack.c.l.b16 %v208
        %v304 = vpack.c.b16 %v301, %v300
        %v305 = vpack.c.b16 %v303, %v302
        %vm308 = vcmask 261120
        %v310 = vsel %vm308, %v280, 0
        %v313 = vsel %vm308, %v281, 0
        %v316 = vsel %vm308, %v282, 0
        %v319 = vsel %vm308, %v283, 0
        %v322 = vsel %vm308, %v284, 0
        %v325 = vsel %vm308, %v285, 0
        %v328 = vsel %vm308, %v286, 0
        %v331 = vsel %vm308, %v287, 0
        %v334 = vsel %vm308, %v288, 0
        %v337 = vsel %vm308, %v289, 0
        %v340 = vsel %vm308, %v290, 0
        %v343 = vsel %vm308, %v291, 0
        %v346 = vsel %vm308, %v292, 0
        %v349 = vsel %vm308, %v293, 0
        %v352 = vsel %vm308, %v294, 0
        %v355 = vsel %vm308, %v295, 0
        %357 = vmatprep.subr.bf16.mxu0 0
        %358 = vmatpush1.bf16.msra.mxu0 %v304
        %359 = vmatprep.subr.bf16.mxu0 0
        %360 = vmatpush1.bf16.msra.mxu0 %v305
        %361 = vmatprep.subr.bf16.mxu0 0
        %362 = vmatpush1.bf16.msra.mxu0 0
        %363 = vmatprep.subr.bf16.mxu0 0
        %364 = vmatpush1.bf16.msra.mxu0 0
        %365 = vmatprep.subr.bf16.mxu0 0
        %366 = vmatpush1.bf16.msra.mxu0 0
        %367 = vmatprep.subr.bf16.mxu0 0
        %368 = vmatpush1.bf16.msra.mxu0 0
        %369 = vmatprep.subr.bf16.mxu0 0
        %370 = vmatpush1.bf16.msra.mxu0 0
        %371 = vmatprep.subr.bf16.mxu0 0
        %372 = vmatpush1.bf16.msra.mxu0 0
        %373 = vmatprep.subr.bf16.mxu0 0
        %374 = vmatpush1.bf16.msra.mxu0 0
        %375 = vmatprep.subr.bf16.mxu0 0
        %376 = vmatpush1.bf16.msra.mxu0 0
        %377 = vmatprep.subr.bf16.mxu0 0
        %378 = vmatpush1.bf16.msra.mxu0 0
        %379 = vmatprep.subr.bf16.mxu0 0
        %380 = vmatpush1.bf16.msra.mxu0 0
        %381 = vmatprep.subr.bf16.mxu0 0
        %382 = vmatpush1.bf16.msra.mxu0 0
        %383 = vmatprep.subr.bf16.mxu0 0
        %384 = vmatpush1.bf16.msra.mxu0 0
        %385 = vmatprep.subr.bf16.mxu0 0
        %386 = vmatpush1.bf16.msra.mxu0 0
        %387 = vmatprep.subr.bf16.mxu0 0
        %388 = vmatpush1.bf16.msra.mxu0 0
        %389 = vmatprep.mubr.bf16.mxu0 0
        %390 = vmatmul.mubr.bf16.gmra.mrb[0].mxu0 %v310
        %v391 = vpop.f32.mrb[0].mxu0
        %v392 = vadd.f32 %v214, %v391
        %v393 = vpop.f32.mrb[0].mxu0
        %v394 = vpop.f32.mrb[0].mxu0
        %v395 = vadd.f32 %v214, %v394
        %v396 = vpop.f32.mrb[0].mxu0
        %397 = vmatprep.mubr.bf16.mxu0 0
        %398 = vmatmul.mubr.bf16.gmra.mrb[0].mxu0 %v313
        %v399 = vpop.f32.mrb[0].mxu0
        %v400 = vadd.f32 %v214, %v399
        %v401 = vpop.f32.mrb[0].mxu0
        %v402 = vpop.f32.mrb[0].mxu0
        %v403 = vadd.f32 %v214, %v402
        %v404 = vpop.f32.mrb[0].mxu0
        %405 = vmatprep.mubr.bf16.mxu0 0
        %406 = vmatmul.mubr.bf16.gmra.mrb[0].mxu0 %v316
        %v407 = vpop.f32.mrb[0].mxu0
        %v408 = vadd.f32 %v214, %v407
        %v409 = vpop.f32.mrb[0].mxu0
        %v410 = vpop.f32.mrb[0].mxu0
        %v411 = vadd.f32 %v214, %v410
        %v412 = vpop.f32.mrb[0].mxu0
        %413 = vmatprep.mubr.bf16.mxu0 0
        %414 = vmatmul.mubr.bf16.gmra.mrb[0].mxu0 %v319
        %v415 = vpop.f32.mrb[0].mxu0
        %v416 = vadd.f32 %v214, %v415
        %v417 = vpop.f32.mrb[0].mxu0
        %v418 = vpop.f32.mrb[0].mxu0
        %v419 = vadd.f32 %v214, %v418
        %v420 = vpop.f32.mrb[0].mxu0
        %421 = vmatprep.mubr.bf16.mxu0 0
        %422 = vmatmul.mubr.bf16.gmra.mrb[0].mxu0 %v322
        %v423 = vpop.f32.mrb[0].mxu0
        %v424 = vadd.f32 %v214, %v423
        %v425 = vpop.f32.mrb[0].mxu0
        %v426 = vpop.f32.mrb[0].mxu0
        %v427 = vadd.f32 %v214, %v426
        %v428 = vpop.f32.mrb[0].mxu0
        %429 = vmatprep.mubr.bf16.mxu0 0
        %430 = vmatmul.mubr.bf16.gmra.mrb[0].mxu0 %v325
        %v431 = vpop.f32.mrb[0].mxu0
        %v432 = vadd.f32 %v214, %v431
        %v433 = vpop.f32.mrb[0].mxu0
        %v434 = vpop.f32.mrb[0].mxu0
        %v435 = vadd.f32 %v214, %v434
        %v436 = vpop.f32.mrb[0].mxu0
        %437 = vmatprep.mubr.bf16.mxu0 0
        %438 = vmatmul.mubr.bf16.gmra.mrb[0].mxu0 %v328
        %v439 = vpop.f32.mrb[0].mxu0
        %v440 = vadd.f32 %v214, %v439
        %v441 = vpop.f32.mrb[0].mxu0
        %v442 = vpop.f32.mrb[0].mxu0
        %v443 = vadd.f32 %v214, %v442
        %v444 = vpop.f32.mrb[0].mxu0
        %445 = vmatprep.mubr.bf16.mxu0 0
        %446 = vmatmul.mubr.bf16.gmra.mrb[0].mxu0 %v331
        %v447 = vpop.f32.mrb[0].mxu0
        %v448 = vadd.f32 %v214, %v447
        %v449 = vpop.f32.mrb[0].mxu0
        %v450 = vpop.f32.mrb[0].mxu0
        %v451 = vadd.f32 %v214, %v450
        %v452 = vpop.f32.mrb[0].mxu0
        %453 = vmatprep.mubr.bf16.mxu0 0
        %454 = vmatmul.mubr.bf16.gmra.mrb[0].mxu0 %v334
        %v455 = vpop.f32.mrb[0].mxu0
        %v456 = vadd.f32 %v214, %v455
        %v457 = vpop.f32.mrb[0].mxu0
        %v458 = vpop.f32.mrb[0].mxu0
        %v459 = vadd.f32 %v214, %v458
        %v460 = vpop.f32.mrb[0].mxu0
        %461 = vmatprep.mubr.bf16.mxu0 0
        %462 = vmatmul.mubr.bf16.gmra.mrb[0].mxu0 %v337
        %v463 = vpop.f32.mrb[0].mxu0
        %v464 = vadd.f32 %v214, %v463
        %v465 = vpop.f32.mrb[0].mxu0
        %v466 = vpop.f32.mrb[0].mxu0
        %v467 = vadd.f32 %v214, %v466
        %v468 = vpop.f32.mrb[0].mxu0
        %469 = vmatprep.mubr.bf16.mxu0 0
        %470 = vmatmul.mubr.bf16.gmra.mrb[0].mxu0 %v340
        %v471 = vpop.f32.mrb[0].mxu0
        %v472 = vadd.f32 %v214, %v471
        %v473 = vpop.f32.mrb[0].mxu0
        %v474 = vpop.f32.mrb[0].mxu0
        %v475 = vadd.f32 %v214, %v474
        %v476 = vpop.f32.mrb[0].mxu0
        %477 = vmatprep.mubr.bf16.mxu0 0
        %478 = vmatmul.mubr.bf16.gmra.mrb[0].mxu0 %v343
        %v479 = vpop.f32.mrb[0].mxu0
        %v480 = vadd.f32 %v214, %v479
        %v481 = vpop.f32.mrb[0].mxu0
        %v482 = vpop.f32.mrb[0].mxu0
        %v483 = vadd.f32 %v214, %v482
        %v484 = vpop.f32.mrb[0].mxu0
        %485 = vmatprep.mubr.bf16.mxu0 0
        %486 = vmatmul.mubr.bf16.gmra.mrb[0].mxu0 %v346
        %v487 = vpop.f32.mrb[0].mxu0
        %v488 = vadd.f32 %v214, %v487
        %v489 = vpop.f32.mrb[0].mxu0
        %v490 = vpop.f32.mrb[0].mxu0
        %v491 = vadd.f32 %v214, %v490
        %v492 = vpop.f32.mrb[0].mxu0
        %493 = vmatprep.mubr.bf16.mxu0 0
        %494 = vmatmul.mubr.bf16.gmra.mrb[0].mxu0 %v349
        %v495 = vpop.f32.mrb[0].mxu0
        %v496 = vadd.f32 %v214, %v495
        %v497 = vpop.f32.mrb[0].mxu0
        %v498 = vpop.f32.mrb[0].mxu0
        %v499 = vadd.f32 %v214, %v498
        %v500 = vpop.f32.mrb[0].mxu0
        %501 = vmatprep.mubr.bf16.mxu0 0
        %502 = vmatmul.mubr.bf16.gmra.mrb[0].mxu0 %v352
        %v503 = vpop.f32.mrb[0].mxu0
        %v504 = vadd.f32 %v214, %v503
        %v505 = vpop.f32.mrb[0].mxu0
        %v506 = vpop.f32.mrb[0].mxu0
        %v507 = vadd.f32 %v214, %v506
        %v508 = vpop.f32.mrb[0].mxu0
        %509 = vmatprep.mubr.bf16.mxu0 0
        %510 = vmatmul.mubr.bf16.gmra.mrb[0].mxu0 %v355
        %v511 = vpop.f32.mrb[0].mxu0
        %v512 = vadd.f32 %v214, %v511
        %v513 = vpop.f32.mrb[0].mxu0
        %v514 = vpop.f32.mrb[0].mxu0
        %v515 = vadd.f32 %v214, %v514
        %v516 = vpop.f32.mrb[0].mxu0
        %517 = vdwg.mxu0
        %v518 = vlaneseq
        %v519 = vand.u32 %v518, 127
        %520 = vmax.xlane.f32.xlu0 %v392
        %v521 = vpop.xlane.xlu0 %520
        %522 = vmax.xlane.f32.xlu0 %v395
        %v523 = vpop.xlane.xlu0 %522
        %524 = vmax.xlane.f32.xlu0 %v400
        %v525 = vpop.xlane.xlu0 %524
        %526 = vmax.xlane.f32.xlu0 %v403
        %v527 = vpop.xlane.xlu0 %526
        %528 = vmax.xlane.f32.xlu0 %v408
        %v529 = vpop.xlane.xlu0 %528
        %530 = vmax.xlane.f32.xlu0 %v411
        %v531 = vpop.xlane.xlu0 %530
        %532 = vmax.xlane.f32.xlu0 %v416
        %v533 = vpop.xlane.xlu0 %532
        %534 = vmax.xlane.f32.xlu0 %v419
        %v535 = vpop.xlane.xlu0 %534
        %536 = vmax.xlane.f32.xlu0 %v424
        %v537 = vpop.xlane.xlu0 %536
        %538 = vmax.xlane.f32.xlu0 %v427
        %v539 = vpop.xlane.xlu0 %538
        %540 = vmax.xlane.f32.xlu0 %v432
        %v541 = vpop.xlane.xlu0 %540
        %542 = vmax.xlane.f32.xlu0 %v435
        %v543 = vpop.xlane.xlu0 %542
        %544 = vmax.xlane.f32.xlu0 %v440
        %v545 = vpop.xlane.xlu0 %544
        %546 = vmax.xlane.f32.xlu0 %v443
        %v547 = vpop.xlane.xlu0 %546
        %548 = vmax.xlane.f32.xlu0 %v448
        %v549 = vpop.xlane.xlu0 %548
        %550 = vmax.xlane.f32.xlu0 %v451
        %v551 = vpop.xlane.xlu0 %550
        %552 = vmax.xlane.f32.xlu0 %v456
        %v553 = vpop.xlane.xlu0 %552
        %554 = vmax.xlane.f32.xlu0 %v459
        %v555 = vpop.xlane.xlu0 %554
        %556 = vmax.xlane.f32.xlu0 %v464
        %v557 = vpop.xlane.xlu0 %556
        %558 = vmax.xlane.f32.xlu0 %v467
        %v559 = vpop.xlane.xlu0 %558
        %560 = vmax.xlane.f32.xlu0 %v472
        %v561 = vpop.xlane.xlu0 %560
        %562 = vmax.xlane.f32.xlu0 %v475
        %v563 = vpop.xlane.xlu0 %562
        %564 = vmax.xlane.f32.xlu0 %v480
        %v565 = vpop.xlane.xlu0 %564
        %566 = vmax.xlane.f32.xlu0 %v483
        %v567 = vpop.xlane.xlu0 %566
        %568 = vmax.xlane.f32.xlu0 %v488
        %v569 = vpop.xlane.xlu0 %568
        %570 = vmax.xlane.f32.xlu0 %v491
        %v571 = vpop.xlane.xlu0 %570
        %572 = vmax.xlane.f32.xlu0 %v496
        %v573 = vpop.xlane.xlu0 %572
        %574 = vmax.xlane.f32.xlu0 %v499
        %v575 = vpop.xlane.xlu0 %574
        %576 = vmax.xlane.f32.xlu0 %v504
        %v577 = vpop.xlane.xlu0 %576
        %578 = vmax.xlane.f32.xlu0 %v507
        %v579 = vpop.xlane.xlu0 %578
        %580 = vmax.xlane.f32.xlu0 %v512
        %v581 = vpop.xlane.xlu0 %580
        %582 = vmax.xlane.f32.xlu0 %v515
        %v583 = vpop.xlane.xlu0 %582
        %vm584 = vcmp.eq.f32.partialorder %v392, %v521
        %vm585 = vcmp.eq.f32.partialorder %v395, %v523
        %vm586 = vcmp.eq.f32.partialorder %v400, %v525
        %vm587 = vcmp.eq.f32.partialorder %v403, %v527
        %vm588 = vcmp.eq.f32.partialorder %v408, %v529
        %vm589 = vcmp.eq.f32.partialorder %v411, %v531
        %vm590 = vcmp.eq.f32.partialorder %v416, %v533
        %vm591 = vcmp.eq.f32.partialorder %v419, %v535
        %vm592 = vcmp.eq.f32.partialorder %v424, %v537
        %vm593 = vcmp.eq.f32.partialorder %v427, %v539
        %vm594 = vcmp.eq.f32.partialorder %v432, %v541
        %vm595 = vcmp.eq.f32.partialorder %v435, %v543
        %vm596 = vcmp.eq.f32.partialorder %v440, %v545
        %vm597 = vcmp.eq.f32.partialorder %v443, %v547
        %vm598 = vcmp.eq.f32.partialorder %v448, %v549
        %vm599 = vcmp.eq.f32.partialorder %v451, %v551
        %vm600 = vcmp.eq.f32.partialorder %v456, %v553
        %vm601 = vcmp.eq.f32.partialorder %v459, %v555
        %vm602 = vcmp.eq.f32.partialorder %v464, %v557
        %vm603 = vcmp.eq.f32.partialorder %v467, %v559
        %vm604 = vcmp.eq.f32.partialorder %v472, %v561
        %vm605 = vcmp.eq.f32.partialorder %v475, %v563
        %vm606 = vcmp.eq.f32.partialorder %v480, %v565
        %vm607 = vcmp.eq.f32.partialorder %v483, %v567
        %vm608 = vcmp.eq.f32.partialorder %v488, %v569
        %vm609 = vcmp.eq.f32.partialorder %v491, %v571
        %vm610 = vcmp.eq.f32.partialorder %v496, %v573
        %vm611 = vcmp.eq.f32.partialorder %v499, %v575
        %vm612 = vcmp.eq.f32.partialorder %v504, %v577
        %vm613 = vcmp.eq.f32.partialorder %v507, %v579
        %vm614 = vcmp.eq.f32.partialorder %v512, %v581
        %vm615 = vcmp.eq.f32.partialorder %v515, %v583
        %v616 = vsel %vm584, %v519, 128
        %v617 = vsel %vm585, %v519, 128
        %v618 = vsel %vm586, %v519, 128
        %v619 = vsel %vm587, %v519, 128
        %v620 = vsel %vm588, %v519, 128
        %v621 = vsel %vm589, %v519, 128
        %v622 = vsel %vm590, %v519, 128
        %v623 = vsel %vm591, %v519, 128
        %v624 = vsel %vm592, %v519, 128
        %v625 = vsel %vm593, %v519, 128
        %v626 = vsel %vm594, %v519, 128
        %v627 = vsel %vm595, %v519, 128
        %v628 = vsel %vm596, %v519, 128
        %v629 = vsel %vm597, %v519, 128
        %v630 = vsel %vm598, %v519, 128
        %v631 = vsel %vm599, %v519, 128
        %v632 = vsel %vm600, %v519, 128
        %v633 = vsel %vm601, %v519, 128
        %v634 = vsel %vm602, %v519, 128
        %v635 = vsel %vm603, %v519, 128
        %v636 = vsel %vm604, %v519, 128
        %v637 = vsel %vm605, %v519, 128
        %v638 = vsel %vm606, %v519, 128
        %v639 = vsel %vm607, %v519, 128
        %v640 = vsel %vm608, %v519, 128
        %v641 = vsel %vm609, %v519, 128
        %v642 = vsel %vm610, %v519, 128
        %v643 = vsel %vm611, %v519, 128
        %v644 = vsel %vm612, %v519, 128
        %v645 = vsel %vm613, %v519, 128
        %v646 = vsel %vm614, %v519, 128
        %v647 = vsel %vm615, %v519, 128
        %v648 = vand.u32 %v616, 65535
        %v649 = vshra.s32 %v616, 16
        %v650 = vcvt.s32.f32 %v648
        %v651 = vcvt.s32.f32 %v649
        %652 = vmin.xlane.f32.xlu0 %v651
        %v653 = vpop.xlane.xlu0 %652
        %vm654 = vcmp.eq.f32.partialorder %v651, %v653
        %v655 = vsel %vm654, %v650, inf
        %656 = vmin.xlane.f32.xlu0 %v655
        %v657 = vpop.xlane.xlu0 %656
        %v658 = vcvt.f32.s32 %v657
        %v659 = vcvt.f32.s32 %v653
        %v660 = vshll.u32 %v659, 16
        %v661 = vadd.s32 %v660, %v658
        %v662 = vand.u32 %v617, 65535
        %v663 = vshra.s32 %v617, 16
        %v664 = vcvt.s32.f32 %v662
        %v665 = vcvt.s32.f32 %v663
        %666 = vmin.xlane.f32.xlu0 %v665
        %v667 = vpop.xlane.xlu0 %666
        %vm668 = vcmp.eq.f32.partialorder %v665, %v667
        %v669 = vsel %vm668, %v664, inf
        %670 = vmin.xlane.f32.xlu0 %v669
        %v671 = vpop.xlane.xlu0 %670
        %v672 = vcvt.f32.s32 %v671
        %v673 = vcvt.f32.s32 %v667
        %v674 = vshll.u32 %v673, 16
        %v675 = vadd.s32 %v674, %v672
        %v676 = vand.u32 %v618, 65535
        %v677 = vshra.s32 %v618, 16
        %v678 = vcvt.s32.f32 %v676
        %v679 = vcvt.s32.f32 %v677
        %680 = vmin.xlane.f32.xlu0 %v679
        %v681 = vpop.xlane.xlu0 %680
        %vm682 = vcmp.eq.f32.partialorder %v679, %v681
        %v683 = vsel %vm682, %v678, inf
        %684 = vmin.xlane.f32.xlu0 %v683
        %v685 = vpop.xlane.xlu0 %684
        %v686 = vcvt.f32.s32 %v685
        %v687 = vcvt.f32.s32 %v681
        %v688 = vshll.u32 %v687, 16
        %v689 = vadd.s32 %v688, %v686
        %v690 = vand.u32 %v619, 65535
        %v691 = vshra.s32 %v619, 16
        %v692 = vcvt.s32.f32 %v690
        %v693 = vcvt.s32.f32 %v691
        %694 = vmin.xlane.f32.xlu0 %v693
        %v695 = vpop.xlane.xlu0 %694
        %vm696 = vcmp.eq.f32.partialorder %v693, %v695
        %v697 = vsel %vm696, %v692, inf
        %698 = vmin.xlane.f32.xlu0 %v697
        %v699 = vpop.xlane.xlu0 %698
        %v700 = vcvt.f32.s32 %v699
        %v701 = vcvt.f32.s32 %v695
        %v702 = vshll.u32 %v701, 16
        %v703 = vadd.s32 %v702, %v700
        %v704 = vand.u32 %v620, 65535
        %v705 = vshra.s32 %v620, 16
        %v706 = vcvt.s32.f32 %v704
        %v707 = vcvt.s32.f32 %v705
        %708 = vmin.xlane.f32.xlu0 %v707
        %v709 = vpop.xlane.xlu0 %708
        %vm710 = vcmp.eq.f32.partialorder %v707, %v709
        %v711 = vsel %vm710, %v706, inf
        %712 = vmin.xlane.f32.xlu0 %v711
        %v713 = vpop.xlane.xlu0 %712
        %v714 = vcvt.f32.s32 %v713
        %v715 = vcvt.f32.s32 %v709
        %v716 = vshll.u32 %v715, 16
        %v717 = vadd.s32 %v716, %v714
        %v718 = vand.u32 %v621, 65535
        %v719 = vshra.s32 %v621, 16
        %v720 = vcvt.s32.f32 %v718
        %v721 = vcvt.s32.f32 %v719
        %722 = vmin.xlane.f32.xlu0 %v721
        %v723 = vpop.xlane.xlu0 %722
        %vm724 = vcmp.eq.f32.partialorder %v721, %v723
        %v725 = vsel %vm724, %v720, inf
        %726 = vmin.xlane.f32.xlu0 %v725
        %v727 = vpop.xlane.xlu0 %726
        %v728 = vcvt.f32.s32 %v727
        %v729 = vcvt.f32.s32 %v723
        %v730 = vshll.u32 %v729, 16
        %v731 = vadd.s32 %v730, %v728
        %v732 = vand.u32 %v622, 65535
        %v733 = vshra.s32 %v622, 16
        %v734 = vcvt.s32.f32 %v732
        %v735 = vcvt.s32.f32 %v733
        %736 = vmin.xlane.f32.xlu0 %v735
        %v737 = vpop.xlane.xlu0 %736
        %vm738 = vcmp.eq.f32.partialorder %v735, %v737
        %v739 = vsel %vm738, %v734, inf
        %740 = vmin.xlane.f32.xlu0 %v739
        %v741 = vpop.xlane.xlu0 %740
        %v742 = vcvt.f32.s32 %v741
        %v743 = vcvt.f32.s32 %v737
        %v744 = vshll.u32 %v743, 16
        %v745 = vadd.s32 %v744, %v742
        %v746 = vand.u32 %v623, 65535
        %v747 = vshra.s32 %v623, 16
        %v748 = vcvt.s32.f32 %v746
        %v749 = vcvt.s32.f32 %v747
        %750 = vmin.xlane.f32.xlu0 %v749
        %v751 = vpop.xlane.xlu0 %750
        %vm752 = vcmp.eq.f32.partialorder %v749, %v751
        %v753 = vsel %vm752, %v748, inf
        %754 = vmin.xlane.f32.xlu0 %v753
        %v755 = vpop.xlane.xlu0 %754
        %v756 = vcvt.f32.s32 %v755
        %v757 = vcvt.f32.s32 %v751
        %v758 = vshll.u32 %v757, 16
        %v759 = vadd.s32 %v758, %v756
        %v760 = vand.u32 %v624, 65535
        %v761 = vshra.s32 %v624, 16
        %v762 = vcvt.s32.f32 %v760
        %v763 = vcvt.s32.f32 %v761
        %764 = vmin.xlane.f32.xlu0 %v763
        %v765 = vpop.xlane.xlu0 %764
        %vm766 = vcmp.eq.f32.partialorder %v763, %v765
        %v767 = vsel %vm766, %v762, inf
        %768 = vmin.xlane.f32.xlu0 %v767
        %v769 = vpop.xlane.xlu0 %768
        %v770 = vcvt.f32.s32 %v769
        %v771 = vcvt.f32.s32 %v765
        %v772 = vshll.u32 %v771, 16
        %v773 = vadd.s32 %v772, %v770
        %v774 = vand.u32 %v625, 65535
        %v775 = vshra.s32 %v625, 16
        %v776 = vcvt.s32.f32 %v774
        %v777 = vcvt.s32.f32 %v775
        %778 = vmin.xlane.f32.xlu0 %v777
        %v779 = vpop.xlane.xlu0 %778
        %vm780 = vcmp.eq.f32.partialorder %v777, %v779
        %v781 = vsel %vm780, %v776, inf
        %782 = vmin.xlane.f32.xlu0 %v781
        %v783 = vpop.xlane.xlu0 %782
        %v784 = vcvt.f32.s32 %v783
        %v785 = vcvt.f32.s32 %v779
        %v786 = vshll.u32 %v785, 16
        %v787 = vadd.s32 %v786, %v784
        %v788 = vand.u32 %v626, 65535
        %v789 = vshra.s32 %v626, 16
        %v790 = vcvt.s32.f32 %v788
        %v791 = vcvt.s32.f32 %v789
        %792 = vmin.xlane.f32.xlu0 %v791
        %v793 = vpop.xlane.xlu0 %792
        %vm794 = vcmp.eq.f32.partialorder %v791, %v793
        %v795 = vsel %vm794, %v790, inf
        %796 = vmin.xlane.f32.xlu0 %v795
        %v797 = vpop.xlane.xlu0 %796
        %v798 = vcvt.f32.s32 %v797
        %v799 = vcvt.f32.s32 %v793
        %v800 = vshll.u32 %v799, 16
        %v801 = vadd.s32 %v800, %v798
        %v802 = vand.u32 %v627, 65535
        %v803 = vshra.s32 %v627, 16
        %v804 = vcvt.s32.f32 %v802
        %v805 = vcvt.s32.f32 %v803
        %806 = vmin.xlane.f32.xlu0 %v805
        %v807 = vpop.xlane.xlu0 %806
        %vm808 = vcmp.eq.f32.partialorder %v805, %v807
        %v809 = vsel %vm808, %v804, inf
        %810 = vmin.xlane.f32.xlu0 %v809
        %v811 = vpop.xlane.xlu0 %810
        %v812 = vcvt.f32.s32 %v811
        %v813 = vcvt.f32.s32 %v807
        %v814 = vshll.u32 %v813, 16
        %v815 = vadd.s32 %v814, %v812
        %v816 = vand.u32 %v628, 65535
        %v817 = vshra.s32 %v628, 16
        %v818 = vcvt.s32.f32 %v816
        %v819 = vcvt.s32.f32 %v817
        %820 = vmin.xlane.f32.xlu0 %v819
        %v821 = vpop.xlane.xlu0 %820
        %vm822 = vcmp.eq.f32.partialorder %v819, %v821
        %v823 = vsel %vm822, %v818, inf
        %824 = vmin.xlane.f32.xlu0 %v823
        %v825 = vpop.xlane.xlu0 %824
        %v826 = vcvt.f32.s32 %v825
        %v827 = vcvt.f32.s32 %v821
        %v828 = vshll.u32 %v827, 16
        %v829 = vadd.s32 %v828, %v826
        %v830 = vand.u32 %v629, 65535
        %v831 = vshra.s32 %v629, 16
        %v832 = vcvt.s32.f32 %v830
        %v833 = vcvt.s32.f32 %v831
        %834 = vmin.xlane.f32.xlu0 %v833
        %v835 = vpop.xlane.xlu0 %834
        %vm836 = vcmp.eq.f32.partialorder %v833, %v835
        %v837 = vsel %vm836, %v832, inf
        %838 = vmin.xlane.f32.xlu0 %v837
        %v839 = vpop.xlane.xlu0 %838
        %v840 = vcvt.f32.s32 %v839
        %v841 = vcvt.f32.s32 %v835
        %v842 = vshll.u32 %v841, 16
        %v843 = vadd.s32 %v842, %v840
        %v844 = vand.u32 %v630, 65535
        %v845 = vshra.s32 %v630, 16
        %v846 = vcvt.s32.f32 %v844
        %v847 = vcvt.s32.f32 %v845
        %848 = vmin.xlane.f32.xlu0 %v847
        %v849 = vpop.xlane.xlu0 %848
        %vm850 = vcmp.eq.f32.partialorder %v847, %v849
        %v851 = vsel %vm850, %v846, inf
        %852 = vmin.xlane.f32.xlu0 %v851
        %v853 = vpop.xlane.xlu0 %852
        %v854 = vcvt.f32.s32 %v853
        %v855 = vcvt.f32.s32 %v849
        %v856 = vshll.u32 %v855, 16
        %v857 = vadd.s32 %v856, %v854
        %v858 = vand.u32 %v631, 65535
        %v859 = vshra.s32 %v631, 16
        %v860 = vcvt.s32.f32 %v858
        %v861 = vcvt.s32.f32 %v859
        %862 = vmin.xlane.f32.xlu0 %v861
        %v863 = vpop.xlane.xlu0 %862
        %vm864 = vcmp.eq.f32.partialorder %v861, %v863
        %v865 = vsel %vm864, %v860, inf
        %866 = vmin.xlane.f32.xlu0 %v865
        %v867 = vpop.xlane.xlu0 %866
        %v868 = vcvt.f32.s32 %v867
        %v869 = vcvt.f32.s32 %v863
        %v870 = vshll.u32 %v869, 16
        %v871 = vadd.s32 %v870, %v868
        %v872 = vand.u32 %v632, 65535
        %v873 = vshra.s32 %v632, 16
        %v874 = vcvt.s32.f32 %v872
        %v875 = vcvt.s32.f32 %v873
        %876 = vmin.xlane.f32.xlu0 %v875
        %v877 = vpop.xlane.xlu0 %876
        %vm878 = vcmp.eq.f32.partialorder %v875, %v877
        %v879 = vsel %vm878, %v874, inf
        %880 = vmin.xlane.f32.xlu0 %v879
        %v881 = vpop.xlane.xlu0 %880
        %v882 = vcvt.f32.s32 %v881
        %v883 = vcvt.f32.s32 %v877
        %v884 = vshll.u32 %v883, 16
        %v885 = vadd.s32 %v884, %v882
        %v886 = vand.u32 %v633, 65535
        %v887 = vshra.s32 %v633, 16
        %v888 = vcvt.s32.f32 %v886
        %v889 = vcvt.s32.f32 %v887
        %890 = vmin.xlane.f32.xlu0 %v889
        %v891 = vpop.xlane.xlu0 %890
        %vm892 = vcmp.eq.f32.partialorder %v889, %v891
        %v893 = vsel %vm892, %v888, inf
        %894 = vmin.xlane.f32.xlu0 %v893
        %v895 = vpop.xlane.xlu0 %894
        %v896 = vcvt.f32.s32 %v895
        %v897 = vcvt.f32.s32 %v891
        %v898 = vshll.u32 %v897, 16
        %v899 = vadd.s32 %v898, %v896
        %v900 = vand.u32 %v634, 65535
        %v901 = vshra.s32 %v634, 16
        %v902 = vcvt.s32.f32 %v900
        %v903 = vcvt.s32.f32 %v901
        %904 = vmin.xlane.f32.xlu0 %v903
        %v905 = vpop.xlane.xlu0 %904
        %vm906 = vcmp.eq.f32.partialorder %v903, %v905
        %v907 = vsel %vm906, %v902, inf
        %908 = vmin.xlane.f32.xlu0 %v907
        %v909 = vpop.xlane.xlu0 %908
        %v910 = vcvt.f32.s32 %v909
        %v911 = vcvt.f32.s32 %v905
        %v912 = vshll.u32 %v911, 16
        %v913 = vadd.s32 %v912, %v910
        %v914 = vand.u32 %v635, 65535
        %v915 = vshra.s32 %v635, 16
        %v916 = vcvt.s32.f32 %v914
        %v917 = vcvt.s32.f32 %v915
        %918 = vmin.xlane.f32.xlu0 %v917
        %v919 = vpop.xlane.xlu0 %918
        %vm920 = vcmp.eq.f32.partialorder %v917, %v919
        %v921 = vsel %vm920, %v916, inf
        %922 = vmin.xlane.f32.xlu0 %v921
        %v923 = vpop.xlane.xlu0 %922
        %v924 = vcvt.f32.s32 %v923
        %v925 = vcvt.f32.s32 %v919
        %v926 = vshll.u32 %v925, 16
        %v927 = vadd.s32 %v926, %v924
        %v928 = vand.u32 %v636, 65535
        %v929 = vshra.s32 %v636, 16
        %v930 = vcvt.s32.f32 %v928
        %v931 = vcvt.s32.f32 %v929
        %932 = vmin.xlane.f32.xlu0 %v931
        %v933 = vpop.xlane.xlu0 %932
        %vm934 = vcmp.eq.f32.partialorder %v931, %v933
        %v935 = vsel %vm934, %v930, inf
        %936 = vmin.xlane.f32.xlu0 %v935
        %v937 = vpop.xlane.xlu0 %936
        %v938 = vcvt.f32.s32 %v937
        %v939 = vcvt.f32.s32 %v933
        %v940 = vshll.u32 %v939, 16
        %v941 = vadd.s32 %v940, %v938
        %v942 = vand.u32 %v637, 65535
        %v943 = vshra.s32 %v637, 16
        %v944 = vcvt.s32.f32 %v942
        %v945 = vcvt.s32.f32 %v943
        %946 = vmin.xlane.f32.xlu0 %v945
        %v947 = vpop.xlane.xlu0 %946
        %vm948 = vcmp.eq.f32.partialorder %v945, %v947
        %v949 = vsel %vm948, %v944, inf
        %950 = vmin.xlane.f32.xlu0 %v949
        %v951 = vpop.xlane.xlu0 %950
        %v952 = vcvt.f32.s32 %v951
        %v953 = vcvt.f32.s32 %v947
        %v954 = vshll.u32 %v953, 16
        %v955 = vadd.s32 %v954, %v952
        %v956 = vand.u32 %v638, 65535
        %v957 = vshra.s32 %v638, 16
        %v958 = vcvt.s32.f32 %v956
        %v959 = vcvt.s32.f32 %v957
        %960 = vmin.xlane.f32.xlu0 %v959
        %v961 = vpop.xlane.xlu0 %960
        %vm962 = vcmp.eq.f32.partialorder %v959, %v961
        %v963 = vsel %vm962, %v958, inf
        %964 = vmin.xlane.f32.xlu0 %v963
        %v965 = vpop.xlane.xlu0 %964
        %v966 = vcvt.f32.s32 %v965
        %v967 = vcvt.f32.s32 %v961
        %v968 = vshll.u32 %v967, 16
        %v969 = vadd.s32 %v968, %v966
        %v970 = vand.u32 %v639, 65535
        %v971 = vshra.s32 %v639, 16
        %v972 = vcvt.s32.f32 %v970
        %v973 = vcvt.s32.f32 %v971
        %974 = vmin.xlane.f32.xlu0 %v973
        %v975 = vpop.xlane.xlu0 %974
        %vm976 = vcmp.eq.f32.partialorder %v973, %v975
        %v977 = vsel %vm976, %v972, inf
        %978 = vmin.xlane.f32.xlu0 %v977
        %v979 = vpop.xlane.xlu0 %978
        %v980 = vcvt.f32.s32 %v979
        %v981 = vcvt.f32.s32 %v975
        %v982 = vshll.u32 %v981, 16
        %v983 = vadd.s32 %v982, %v980
        %v984 = vand.u32 %v640, 65535
        %v985 = vshra.s32 %v640, 16
        %v986 = vcvt.s32.f32 %v984
        %v987 = vcvt.s32.f32 %v985
        %988 = vmin.xlane.f32.xlu0 %v987
        %v989 = vpop.xlane.xlu0 %988
        %vm990 = vcmp.eq.f32.partialorder %v987, %v989
        %v991 = vsel %vm990, %v986, inf
        %992 = vmin.xlane.f32.xlu0 %v991
        %v993 = vpop.xlane.xlu0 %992
        %v994 = vcvt.f32.s32 %v993
        %v995 = vcvt.f32.s32 %v989
        %v996 = vshll.u32 %v995, 16
        %v997 = vadd.s32 %v996, %v994
        %v998 = vand.u32 %v641, 65535
        %v999 = vshra.s32 %v641, 16
        %v1000 = vcvt.s32.f32 %v998
        %v1001 = vcvt.s32.f32 %v999
        %1002 = vmin.xlane.f32.xlu0 %v1001
        %v1003 = vpop.xlane.xlu0 %1002
        %vm1004 = vcmp.eq.f32.partialorder %v1001, %v1003
        %v1005 = vsel %vm1004, %v1000, inf
        %1006 = vmin.xlane.f32.xlu0 %v1005
        %v1007 = vpop.xlane.xlu0 %1006
        %v1008 = vcvt.f32.s32 %v1007
        %v1009 = vcvt.f32.s32 %v1003
        %v1010 = vshll.u32 %v1009, 16
        %v1011 = vadd.s32 %v1010, %v1008
        %v1012 = vand.u32 %v642, 65535
        %v1013 = vshra.s32 %v642, 16
        %v1014 = vcvt.s32.f32 %v1012
        %v1015 = vcvt.s32.f32 %v1013
        %1016 = vmin.xlane.f32.xlu0 %v1015
        %v1017 = vpop.xlane.xlu0 %1016
        %vm1018 = vcmp.eq.f32.partialorder %v1015, %v1017
        %v1019 = vsel %vm1018, %v1014, inf
        %1020 = vmin.xlane.f32.xlu0 %v1019
        %v1021 = vpop.xlane.xlu0 %1020
        %v1022 = vcvt.f32.s32 %v1021
        %v1023 = vcvt.f32.s32 %v1017
        %v1024 = vshll.u32 %v1023, 16
        %v1025 = vadd.s32 %v1024, %v1022
        %v1026 = vand.u32 %v643, 65535
        %v1027 = vshra.s32 %v643, 16
        %v1028 = vcvt.s32.f32 %v1026
        %v1029 = vcvt.s32.f32 %v1027
        %1030 = vmin.xlane.f32.xlu0 %v1029
        %v1031 = vpop.xlane.xlu0 %1030
        %vm1032 = vcmp.eq.f32.partialorder %v1029, %v1031
        %v1033 = vsel %vm1032, %v1028, inf
        %1034 = vmin.xlane.f32.xlu0 %v1033
        %v1035 = vpop.xlane.xlu0 %1034
        %v1036 = vcvt.f32.s32 %v1035
        %v1037 = vcvt.f32.s32 %v1031
        %v1038 = vshll.u32 %v1037, 16
        %v1039 = vadd.s32 %v1038, %v1036
        %v1040 = vand.u32 %v644, 65535
        %v1041 = vshra.s32 %v644, 16
        %v1042 = vcvt.s32.f32 %v1040
        %v1043 = vcvt.s32.f32 %v1041
        %1044 = vmin.xlane.f32.xlu0 %v1043
        %v1045 = vpop.xlane.xlu0 %1044
        %vm1046 = vcmp.eq.f32.partialorder %v1043, %v1045
        %v1047 = vsel %vm1046, %v1042, inf
        %1048 = vmin.xlane.f32.xlu0 %v1047
        %v1049 = vpop.xlane.xlu0 %1048
        %v1050 = vcvt.f32.s32 %v1049
        %v1051 = vcvt.f32.s32 %v1045
        %v1052 = vshll.u32 %v1051, 16
        %v1053 = vadd.s32 %v1052, %v1050
        %v1054 = vand.u32 %v645, 65535
        %v1055 = vshra.s32 %v645, 16
        %v1056 = vcvt.s32.f32 %v1054
        %v1057 = vcvt.s32.f32 %v1055
        %1058 = vmin.xlane.f32.xlu0 %v1057
        %v1059 = vpop.xlane.xlu0 %1058
        %vm1060 = vcmp.eq.f32.partialorder %v1057, %v1059
        %v1061 = vsel %vm1060, %v1056, inf
        %1062 = vmin.xlane.f32.xlu0 %v1061
        %v1063 = vpop.xlane.xlu0 %1062
        %v1064 = vcvt.f32.s32 %v1063
        %v1065 = vcvt.f32.s32 %v1059
        %v1066 = vshll.u32 %v1065, 16
        %v1067 = vadd.s32 %v1066, %v1064
        %v1068 = vand.u32 %v646, 65535
        %v1069 = vshra.s32 %v646, 16
        %v1070 = vcvt.s32.f32 %v1068
        %v1071 = vcvt.s32.f32 %v1069
        %1072 = vmin.xlane.f32.xlu0 %v1071
        %v1073 = vpop.xlane.xlu0 %1072
        %vm1074 = vcmp.eq.f32.partialorder %v1071, %v1073
        %v1075 = vsel %vm1074, %v1070, inf
        %1076 = vmin.xlane.f32.xlu0 %v1075
        %v1077 = vpop.xlane.xlu0 %1076
        %v1078 = vcvt.f32.s32 %v1077
        %v1079 = vcvt.f32.s32 %v1073
        %v1080 = vshll.u32 %v1079, 16
        %v1081 = vadd.s32 %v1080, %v1078
        %v1082 = vand.u32 %v647, 65535
        %v1083 = vshra.s32 %v647, 16
        %v1084 = vcvt.s32.f32 %v1082
        %v1085 = vcvt.s32.f32 %v1083
        %1086 = vmin.xlane.f32.xlu0 %v1085
        %v1087 = vpop.xlane.xlu0 %1086
        %vm1088 = vcmp.eq.f32.partialorder %v1085, %v1087
        %v1089 = vsel %vm1088, %v1084, inf
        %1090 = vmin.xlane.f32.xlu0 %v1089
        %v1091 = vpop.xlane.xlu0 %1090
        %v1092 = vcvt.f32.s32 %v1091
        %v1093 = vcvt.f32.s32 %v1087
        %v1094 = vshll.u32 %v1093, 16
        %v1095 = vadd.s32 %v1094, %v1092
        %vm1096 = vcmp.eq.s32.totalorder %v519, %v661
        %vm1097 = vcmp.eq.s32.totalorder %v519, %v675
        %vm1098 = vcmp.eq.s32.totalorder %v519, %v689
        %vm1099 = vcmp.eq.s32.totalorder %v519, %v703
        %vm1100 = vcmp.eq.s32.totalorder %v519, %v717
        %vm1101 = vcmp.eq.s32.totalorder %v519, %v731
        %vm1102 = vcmp.eq.s32.totalorder %v519, %v745
        %vm1103 = vcmp.eq.s32.totalorder %v519, %v759
        %vm1104 = vcmp.eq.s32.totalorder %v519, %v773
        %vm1105 = vcmp.eq.s32.totalorder %v519, %v787
        %vm1106 = vcmp.eq.s32.totalorder %v519, %v801
        %vm1107 = vcmp.eq.s32.totalorder %v519, %v815
        %vm1108 = vcmp.eq.s32.totalorder %v519, %v829
        %vm1109 = vcmp.eq.s32.totalorder %v519, %v843
        %vm1110 = vcmp.eq.s32.totalorder %v519, %v857
        %vm1111 = vcmp.eq.s32.totalorder %v519, %v871
        %vm1112 = vcmp.eq.s32.totalorder %v519, %v885
        %vm1113 = vcmp.eq.s32.totalorder %v519, %v899
        %vm1114 = vcmp.eq.s32.totalorder %v519, %v913
        %vm1115 = vcmp.eq.s32.totalorder %v519, %v927
        %vm1116 = vcmp.eq.s32.totalorder %v519, %v941
        %vm1117 = vcmp.eq.s32.totalorder %v519, %v955
        %vm1118 = vcmp.eq.s32.totalorder %v519, %v969
        %vm1119 = vcmp.eq.s32.totalorder %v519, %v983
        %vm1120 = vcmp.eq.s32.totalorder %v519, %v997
        %vm1121 = vcmp.eq.s32.totalorder %v519, %v1011
        %vm1122 = vcmp.eq.s32.totalorder %v519, %v1025
        %vm1123 = vcmp.eq.s32.totalorder %v519, %v1039
        %vm1124 = vcmp.eq.s32.totalorder %v519, %v1053
        %vm1125 = vcmp.eq.s32.totalorder %v519, %v1067
        %vm1126 = vcmp.eq.s32.totalorder %v519, %v1081
        %vm1127 = vcmp.eq.s32.totalorder %v519, %v1095
        %v1128 = vsel %vm1096, -inf, %v392
        %v1129 = vsel %vm1097, -inf, %v395
        %v1130 = vsel %vm1098, -inf, %v400
        %v1131 = vsel %vm1099, -inf, %v403
        %v1132 = vsel %vm1100, -inf, %v408
        %v1133 = vsel %vm1101, -inf, %v411
        %v1134 = vsel %vm1102, -inf, %v416
        %v1135 = vsel %vm1103, -inf, %v419
        %v1136 = vsel %vm1104, -inf, %v424
        %v1137 = vsel %vm1105, -inf, %v427
        %v1138 = vsel %vm1106, -inf, %v432
        %v1139 = vsel %vm1107, -inf, %v435
        %v1140 = vsel %vm1108, -inf, %v440
        %v1141 = vsel %vm1109, -inf, %v443
        %v1142 = vsel %vm1110, -inf, %v448
        %v1143 = vsel %vm1111, -inf, %v451
        %v1144 = vsel %vm1112, -inf, %v456
        %v1145 = vsel %vm1113, -inf, %v459
        %v1146 = vsel %vm1114, -inf, %v464
        %v1147 = vsel %vm1115, -inf, %v467
        %v1148 = vsel %vm1116, -inf, %v472
        %v1149 = vsel %vm1117, -inf, %v475
        %v1150 = vsel %vm1118, -inf, %v480
        %v1151 = vsel %vm1119, -inf, %v483
        %v1152 = vsel %vm1120, -inf, %v488
        %v1153 = vsel %vm1121, -inf, %v491
        %v1154 = vsel %vm1122, -inf, %v496
        %v1155 = vsel %vm1123, -inf, %v499
        %v1156 = vsel %vm1124, -inf, %v504
        %v1157 = vsel %vm1125, -inf, %v507
        %v1158 = vsel %vm1126, -inf, %v512
        %v1159 = vsel %vm1127, -inf, %v515
        %1160 = vmax.xlane.f32.xlu0 %v1128
        %v1161 = vpop.xlane.xlu0 %1160
        %1162 = vmax.xlane.f32.xlu0 %v1129
        %v1163 = vpop.xlane.xlu0 %1162
        %1164 = vmax.xlane.f32.xlu0 %v1130
        %v1165 = vpop.xlane.xlu0 %1164
        %1166 = vmax.xlane.f32.xlu0 %v1131
        %v1167 = vpop.xlane.xlu0 %1166
        %1168 = vmax.xlane.f32.xlu0 %v1132
        %v1169 = vpop.xlane.xlu0 %1168
        %1170 = vmax.xlane.f32.xlu0 %v1133
        %v1171 = vpop.xlane.xlu0 %1170
        %1172 = vmax.xlane.f32.xlu0 %v1134
        %v1173 = vpop.xlane.xlu0 %1172
        %1174 = vmax.xlane.f32.xlu0 %v1135
        %v1175 = vpop.xlane.xlu0 %1174
        %1176 = vmax.xlane.f32.xlu0 %v1136
        %v1177 = vpop.xlane.xlu0 %1176
        %1178 = vmax.xlane.f32.xlu0 %v1137
        %v1179 = vpop.xlane.xlu0 %1178
        %1180 = vmax.xlane.f32.xlu0 %v1138
        %v1181 = vpop.xlane.xlu0 %1180
        %1182 = vmax.xlane.f32.xlu0 %v1139
        %v1183 = vpop.xlane.xlu0 %1182
        %1184 = vmax.xlane.f32.xlu0 %v1140
        %v1185 = vpop.xlane.xlu0 %1184
        %1186 = vmax.xlane.f32.xlu0 %v1141
        %v1187 = vpop.xlane.xlu0 %1186
        %1188 = vmax.xlane.f32.xlu0 %v1142
        %v1189 = vpop.xlane.xlu0 %1188
        %1190 = vmax.xlane.f32.xlu0 %v1143
        %v1191 = vpop.xlane.xlu0 %1190
        %1192 = vmax.xlane.f32.xlu0 %v1144
        %v1193 = vpop.xlane.xlu0 %1192
        %1194 = vmax.xlane.f32.xlu0 %v1145
        %v1195 = vpop.xlane.xlu0 %1194
        %1196 = vmax.xlane.f32.xlu0 %v1146
        %v1197 = vpop.xlane.xlu0 %1196
        %1198 = vmax.xlane.f32.xlu0 %v1147
        %v1199 = vpop.xlane.xlu0 %1198
        %1200 = vmax.xlane.f32.xlu0 %v1148
        %v1201 = vpop.xlane.xlu0 %1200
        %1202 = vmax.xlane.f32.xlu0 %v1149
        %v1203 = vpop.xlane.xlu0 %1202
        %1204 = vmax.xlane.f32.xlu0 %v1150
        %v1205 = vpop.xlane.xlu0 %1204
        %1206 = vmax.xlane.f32.xlu0 %v1151
        %v1207 = vpop.xlane.xlu0 %1206
        %1208 = vmax.xlane.f32.xlu0 %v1152
        %v1209 = vpop.xlane.xlu0 %1208
        %1210 = vmax.xlane.f32.xlu0 %v1153
        %v1211 = vpop.xlane.xlu0 %1210
        %1212 = vmax.xlane.f32.xlu0 %v1154
        %v1213 = vpop.xlane.xlu0 %1212
        %1214 = vmax.xlane.f32.xlu0 %v1155
        %v1215 = vpop.xlane.xlu0 %1214
        %1216 = vmax.xlane.f32.xlu0 %v1156
        %v1217 = vpop.xlane.xlu0 %1216
        %1218 = vmax.xlane.f32.xlu0 %v1157
        %v1219 = vpop.xlane.xlu0 %1218
        %1220 = vmax.xlane.f32.xlu0 %v1158
        %v1221 = vpop.xlane.xlu0 %1220
        %1222 = vmax.xlane.f32.xlu0 %v1159
        %v1223 = vpop.xlane.xlu0 %1222
        %vm1224 = vcmp.eq.f32.partialorder %v1128, %v1161
        %vm1225 = vcmp.eq.f32.partialorder %v1129, %v1163
        %vm1226 = vcmp.eq.f32.partialorder %v1130, %v1165
        %vm1227 = vcmp.eq.f32.partialorder %v1131, %v1167
        %vm1228 = vcmp.eq.f32.partialorder %v1132, %v1169
        %vm1229 = vcmp.eq.f32.partialorder %v1133, %v1171
        %vm1230 = vcmp.eq.f32.partialorder %v1134, %v1173
        %vm1231 = vcmp.eq.f32.partialorder %v1135, %v1175
        %vm1232 = vcmp.eq.f32.partialorder %v1136, %v1177
        %vm1233 = vcmp.eq.f32.partialorder %v1137, %v1179
        %vm1234 = vcmp.eq.f32.partialorder %v1138, %v1181
        %vm1235 = vcmp.eq.f32.partialorder %v1139, %v1183
        %vm1236 = vcmp.eq.f32.partialorder %v1140, %v1185
        %vm1237 = vcmp.eq.f32.partialorder %v1141, %v1187
        %vm1238 = vcmp.eq.f32.partialorder %v1142, %v1189
        %vm1239 = vcmp.eq.f32.partialorder %v1143, %v1191
        %vm1240 = vcmp.eq.f32.partialorder %v1144, %v1193
        %vm1241 = vcmp.eq.f32.partialorder %v1145, %v1195
        %vm1242 = vcmp.eq.f32.partialorder %v1146, %v1197
        %vm1243 = vcmp.eq.f32.partialorder %v1147, %v1199
        %vm1244 = vcmp.eq.f32.partialorder %v1148, %v1201
        %vm1245 = vcmp.eq.f32.partialorder %v1149, %v1203
        %vm1246 = vcmp.eq.f32.partialorder %v1150, %v1205
        %vm1247 = vcmp.eq.f32.partialorder %v1151, %v1207
        %vm1248 = vcmp.eq.f32.partialorder %v1152, %v1209
        %vm1249 = vcmp.eq.f32.partialorder %v1153, %v1211
        %vm1250 = vcmp.eq.f32.partialorder %v1154, %v1213
        %vm1251 = vcmp.eq.f32.partialorder %v1155, %v1215
        %vm1252 = vcmp.eq.f32.partialorder %v1156, %v1217
        %vm1253 = vcmp.eq.f32.partialorder %v1157, %v1219
        %vm1254 = vcmp.eq.f32.partialorder %v1158, %v1221
        %vm1255 = vcmp.eq.f32.partialorder %v1159, %v1223
        %v1256 = vsel %vm1224, %v519, 128
        %v1257 = vsel %vm1225, %v519, 128
        %v1258 = vsel %vm1226, %v519, 128
        %v1259 = vsel %vm1227, %v519, 128
        %v1260 = vsel %vm1228, %v519, 128
        %v1261 = vsel %vm1229, %v519, 128
        %v1262 = vsel %vm1230, %v519, 128
        %v1263 = vsel %vm1231, %v519, 128
        %v1264 = vsel %vm1232, %v519, 128
        %v1265 = vsel %vm1233, %v519, 128
        %v1266 = vsel %vm1234, %v519, 128
        %v1267 = vsel %vm1235, %v519, 128
        %v1268 = vsel %vm1236, %v519, 128
        %v1269 = vsel %vm1237, %v519, 128
        %v1270 = vsel %vm1238, %v519, 128
        %v1271 = vsel %vm1239, %v519, 128
        %v1272 = vsel %vm1240, %v519, 128
        %v1273 = vsel %vm1241, %v519, 128
        %v1274 = vsel %vm1242, %v519, 128
        %v1275 = vsel %vm1243, %v519, 128
        %v1276 = vsel %vm1244, %v519, 128
        %v1277 = vsel %vm1245, %v519, 128
        %v1278 = vsel %vm1246, %v519, 128
        %v1279 = vsel %vm1247, %v519, 128
        %v1280 = vsel %vm1248, %v519, 128
        %v1281 = vsel %vm1249, %v519, 128
        %v1282 = vsel %vm1250, %v519, 128
        %v1283 = vsel %vm1251, %v519, 128
        %v1284 = vsel %vm1252, %v519, 128
        %v1285 = vsel %vm1253, %v519, 128
        %v1286 = vsel %vm1254, %v519, 128
        %v1287 = vsel %vm1255, %v519, 128
        %v1288 = vand.u32 %v1256, 65535
        %v1289 = vshra.s32 %v1256, 16
        %v1290 = vcvt.s32.f32 %v1288
        %v1291 = vcvt.s32.f32 %v1289
        %1292 = vmin.xlane.f32.xlu0 %v1291
        %v1293 = vpop.xlane.xlu0 %1292
        %vm1294 = vcmp.eq.f32.partialorder %v1291, %v1293
        %v1295 = vsel %vm1294, %v1290, inf
        %1296 = vmin.xlane.f32.xlu0 %v1295
        %v1297 = vpop.xlane.xlu0 %1296
        %v1298 = vcvt.f32.s32 %v1297
        %v1299 = vcvt.f32.s32 %v1293
        %v1300 = vshll.u32 %v1299, 16
        %v1301 = vadd.s32 %v1300, %v1298
        %v1302 = vand.u32 %v1257, 65535
        %v1303 = vshra.s32 %v1257, 16
        %v1304 = vcvt.s32.f32 %v1302
        %v1305 = vcvt.s32.f32 %v1303
        %1306 = vmin.xlane.f32.xlu0 %v1305
        %v1307 = vpop.xlane.xlu0 %1306
        %vm1308 = vcmp.eq.f32.partialorder %v1305, %v1307
        %v1309 = vsel %vm1308, %v1304, inf
        %1310 = vmin.xlane.f32.xlu0 %v1309
        %v1311 = vpop.xlane.xlu0 %1310
        %v1312 = vcvt.f32.s32 %v1311
        %v1313 = vcvt.f32.s32 %v1307
        %v1314 = vshll.u32 %v1313, 16
        %v1315 = vadd.s32 %v1314, %v1312
        %v1316 = vand.u32 %v1258, 65535
        %v1317 = vshra.s32 %v1258, 16
        %v1318 = vcvt.s32.f32 %v1316
        %v1319 = vcvt.s32.f32 %v1317
        %1320 = vmin.xlane.f32.xlu0 %v1319
        %v1321 = vpop.xlane.xlu0 %1320
        %vm1322 = vcmp.eq.f32.partialorder %v1319, %v1321
        %v1323 = vsel %vm1322, %v1318, inf
        %1324 = vmin.xlane.f32.xlu0 %v1323
        %v1325 = vpop.xlane.xlu0 %1324
        %v1326 = vcvt.f32.s32 %v1325
        %v1327 = vcvt.f32.s32 %v1321
        %v1328 = vshll.u32 %v1327, 16
        %v1329 = vadd.s32 %v1328, %v1326
        %v1330 = vand.u32 %v1259, 65535
        %v1331 = vshra.s32 %v1259, 16
        %v1332 = vcvt.s32.f32 %v1330
        %v1333 = vcvt.s32.f32 %v1331
        %1334 = vmin.xlane.f32.xlu0 %v1333
        %v1335 = vpop.xlane.xlu0 %1334
        %vm1336 = vcmp.eq.f32.partialorder %v1333, %v1335
        %v1337 = vsel %vm1336, %v1332, inf
        %1338 = vmin.xlane.f32.xlu0 %v1337
        %v1339 = vpop.xlane.xlu0 %1338
        %v1340 = vcvt.f32.s32 %v1339
        %v1341 = vcvt.f32.s32 %v1335
        %v1342 = vshll.u32 %v1341, 16
        %v1343 = vadd.s32 %v1342, %v1340
        %v1344 = vand.u32 %v1260, 65535
        %v1345 = vshra.s32 %v1260, 16
        %v1346 = vcvt.s32.f32 %v1344
        %v1347 = vcvt.s32.f32 %v1345
        %1348 = vmin.xlane.f32.xlu0 %v1347
        %v1349 = vpop.xlane.xlu0 %1348
        %vm1350 = vcmp.eq.f32.partialorder %v1347, %v1349
        %v1351 = vsel %vm1350, %v1346, inf
        %1352 = vmin.xlane.f32.xlu0 %v1351
        %v1353 = vpop.xlane.xlu0 %1352
        %v1354 = vcvt.f32.s32 %v1353
        %v1355 = vcvt.f32.s32 %v1349
        %v1356 = vshll.u32 %v1355, 16
        %v1357 = vadd.s32 %v1356, %v1354
        %v1358 = vand.u32 %v1261, 65535
        %v1359 = vshra.s32 %v1261, 16
        %v1360 = vcvt.s32.f32 %v1358
        %v1361 = vcvt.s32.f32 %v1359
        %1362 = vmin.xlane.f32.xlu0 %v1361
        %v1363 = vpop.xlane.xlu0 %1362
        %vm1364 = vcmp.eq.f32.partialorder %v1361, %v1363
        %v1365 = vsel %vm1364, %v1360, inf
        %1366 = vmin.xlane.f32.xlu0 %v1365
        %v1367 = vpop.xlane.xlu0 %1366
        %v1368 = vcvt.f32.s32 %v1367
        %v1369 = vcvt.f32.s32 %v1363
        %v1370 = vshll.u32 %v1369, 16
        %v1371 = vadd.s32 %v1370, %v1368
        %v1372 = vand.u32 %v1262, 65535
        %v1373 = vshra.s32 %v1262, 16
        %v1374 = vcvt.s32.f32 %v1372
        %v1375 = vcvt.s32.f32 %v1373
        %1376 = vmin.xlane.f32.xlu0 %v1375
        %v1377 = vpop.xlane.xlu0 %1376
        %vm1378 = vcmp.eq.f32.partialorder %v1375, %v1377
        %v1379 = vsel %vm1378, %v1374, inf
        %1380 = vmin.xlane.f32.xlu0 %v1379
        %v1381 = vpop.xlane.xlu0 %1380
        %v1382 = vcvt.f32.s32 %v1381
        %v1383 = vcvt.f32.s32 %v1377
        %v1384 = vshll.u32 %v1383, 16
        %v1385 = vadd.s32 %v1384, %v1382
        %v1386 = vand.u32 %v1263, 65535
        %v1387 = vshra.s32 %v1263, 16
        %v1388 = vcvt.s32.f32 %v1386
        %v1389 = vcvt.s32.f32 %v1387
        %1390 = vmin.xlane.f32.xlu0 %v1389
        %v1391 = vpop.xlane.xlu0 %1390
        %vm1392 = vcmp.eq.f32.partialorder %v1389, %v1391
        %v1393 = vsel %vm1392, %v1388, inf
        %1394 = vmin.xlane.f32.xlu0 %v1393
        %v1395 = vpop.xlane.xlu0 %1394
        %v1396 = vcvt.f32.s32 %v1395
        %v1397 = vcvt.f32.s32 %v1391
        %v1398 = vshll.u32 %v1397, 16
        %v1399 = vadd.s32 %v1398, %v1396
        %v1400 = vand.u32 %v1264, 65535
        %v1401 = vshra.s32 %v1264, 16
        %v1402 = vcvt.s32.f32 %v1400
        %v1403 = vcvt.s32.f32 %v1401
        %1404 = vmin.xlane.f32.xlu0 %v1403
        %v1405 = vpop.xlane.xlu0 %1404
        %vm1406 = vcmp.eq.f32.partialorder %v1403, %v1405
        %v1407 = vsel %vm1406, %v1402, inf
        %1408 = vmin.xlane.f32.xlu0 %v1407
        %v1409 = vpop.xlane.xlu0 %1408
        %v1410 = vcvt.f32.s32 %v1409
        %v1411 = vcvt.f32.s32 %v1405
        %v1412 = vshll.u32 %v1411, 16
        %v1413 = vadd.s32 %v1412, %v1410
        %v1414 = vand.u32 %v1265, 65535
        %v1415 = vshra.s32 %v1265, 16
        %v1416 = vcvt.s32.f32 %v1414
        %v1417 = vcvt.s32.f32 %v1415
        %1418 = vmin.xlane.f32.xlu0 %v1417
        %v1419 = vpop.xlane.xlu0 %1418
        %vm1420 = vcmp.eq.f32.partialorder %v1417, %v1419
        %v1421 = vsel %vm1420, %v1416, inf
        %1422 = vmin.xlane.f32.xlu0 %v1421
        %v1423 = vpop.xlane.xlu0 %1422
        %v1424 = vcvt.f32.s32 %v1423
        %v1425 = vcvt.f32.s32 %v1419
        %v1426 = vshll.u32 %v1425, 16
        %v1427 = vadd.s32 %v1426, %v1424
        %v1428 = vand.u32 %v1266, 65535
        %v1429 = vshra.s32 %v1266, 16
        %v1430 = vcvt.s32.f32 %v1428
        %v1431 = vcvt.s32.f32 %v1429
        %1432 = vmin.xlane.f32.xlu0 %v1431
        %v1433 = vpop.xlane.xlu0 %1432
        %vm1434 = vcmp.eq.f32.partialorder %v1431, %v1433
        %v1435 = vsel %vm1434, %v1430, inf
        %1436 = vmin.xlane.f32.xlu0 %v1435
        %v1437 = vpop.xlane.xlu0 %1436
        %v1438 = vcvt.f32.s32 %v1437
        %v1439 = vcvt.f32.s32 %v1433
        %v1440 = vshll.u32 %v1439, 16
        %v1441 = vadd.s32 %v1440, %v1438
        %v1442 = vand.u32 %v1267, 65535
        %v1443 = vshra.s32 %v1267, 16
        %v1444 = vcvt.s32.f32 %v1442
        %v1445 = vcvt.s32.f32 %v1443
        %1446 = vmin.xlane.f32.xlu0 %v1445
        %v1447 = vpop.xlane.xlu0 %1446
        %vm1448 = vcmp.eq.f32.partialorder %v1445, %v1447
        %v1449 = vsel %vm1448, %v1444, inf
        %1450 = vmin.xlane.f32.xlu0 %v1449
        %v1451 = vpop.xlane.xlu0 %1450
        %v1452 = vcvt.f32.s32 %v1451
        %v1453 = vcvt.f32.s32 %v1447
        %v1454 = vshll.u32 %v1453, 16
        %v1455 = vadd.s32 %v1454, %v1452
        %v1456 = vand.u32 %v1268, 65535
        %v1457 = vshra.s32 %v1268, 16
        %v1458 = vcvt.s32.f32 %v1456
        %v1459 = vcvt.s32.f32 %v1457
        %1460 = vmin.xlane.f32.xlu0 %v1459
        %v1461 = vpop.xlane.xlu0 %1460
        %vm1462 = vcmp.eq.f32.partialorder %v1459, %v1461
        %v1463 = vsel %vm1462, %v1458, inf
        %1464 = vmin.xlane.f32.xlu0 %v1463
        %v1465 = vpop.xlane.xlu0 %1464
        %v1466 = vcvt.f32.s32 %v1465
        %v1467 = vcvt.f32.s32 %v1461
        %v1468 = vshll.u32 %v1467, 16
        %v1469 = vadd.s32 %v1468, %v1466
        %v1470 = vand.u32 %v1269, 65535
        %v1471 = vshra.s32 %v1269, 16
        %v1472 = vcvt.s32.f32 %v1470
        %v1473 = vcvt.s32.f32 %v1471
        %1474 = vmin.xlane.f32.xlu0 %v1473
        %v1475 = vpop.xlane.xlu0 %1474
        %vm1476 = vcmp.eq.f32.partialorder %v1473, %v1475
        %v1477 = vsel %vm1476, %v1472, inf
        %1478 = vmin.xlane.f32.xlu0 %v1477
        %v1479 = vpop.xlane.xlu0 %1478
        %v1480 = vcvt.f32.s32 %v1479
        %v1481 = vcvt.f32.s32 %v1475
        %v1482 = vshll.u32 %v1481, 16
        %v1483 = vadd.s32 %v1482, %v1480
        %v1484 = vand.u32 %v1270, 65535
        %v1485 = vshra.s32 %v1270, 16
        %v1486 = vcvt.s32.f32 %v1484
        %v1487 = vcvt.s32.f32 %v1485
        %1488 = vmin.xlane.f32.xlu0 %v1487
        %v1489 = vpop.xlane.xlu0 %1488
        %vm1490 = vcmp.eq.f32.partialorder %v1487, %v1489
        %v1491 = vsel %vm1490, %v1486, inf
        %1492 = vmin.xlane.f32.xlu0 %v1491
        %v1493 = vpop.xlane.xlu0 %1492
        %v1494 = vcvt.f32.s32 %v1493
        %v1495 = vcvt.f32.s32 %v1489
        %v1496 = vshll.u32 %v1495, 16
        %v1497 = vadd.s32 %v1496, %v1494
        %v1498 = vand.u32 %v1271, 65535
        %v1499 = vshra.s32 %v1271, 16
        %v1500 = vcvt.s32.f32 %v1498
        %v1501 = vcvt.s32.f32 %v1499
        %1502 = vmin.xlane.f32.xlu0 %v1501
        %v1503 = vpop.xlane.xlu0 %1502
        %vm1504 = vcmp.eq.f32.partialorder %v1501, %v1503
        %v1505 = vsel %vm1504, %v1500, inf
        %1506 = vmin.xlane.f32.xlu0 %v1505
        %v1507 = vpop.xlane.xlu0 %1506
        %v1508 = vcvt.f32.s32 %v1507
        %v1509 = vcvt.f32.s32 %v1503
        %v1510 = vshll.u32 %v1509, 16
        %v1511 = vadd.s32 %v1510, %v1508
        %v1512 = vand.u32 %v1272, 65535
        %v1513 = vshra.s32 %v1272, 16
        %v1514 = vcvt.s32.f32 %v1512
        %v1515 = vcvt.s32.f32 %v1513
        %1516 = vmin.xlane.f32.xlu0 %v1515
        %v1517 = vpop.xlane.xlu0 %1516
        %vm1518 = vcmp.eq.f32.partialorder %v1515, %v1517
        %v1519 = vsel %vm1518, %v1514, inf
        %1520 = vmin.xlane.f32.xlu0 %v1519
        %v1521 = vpop.xlane.xlu0 %1520
        %v1522 = vcvt.f32.s32 %v1521
        %v1523 = vcvt.f32.s32 %v1517
        %v1524 = vshll.u32 %v1523, 16
        %v1525 = vadd.s32 %v1524, %v1522
        %v1526 = vand.u32 %v1273, 65535
        %v1527 = vshra.s32 %v1273, 16
        %v1528 = vcvt.s32.f32 %v1526
        %v1529 = vcvt.s32.f32 %v1527
        %1530 = vmin.xlane.f32.xlu0 %v1529
        %v1531 = vpop.xlane.xlu0 %1530
        %vm1532 = vcmp.eq.f32.partialorder %v1529, %v1531
        %v1533 = vsel %vm1532, %v1528, inf
        %1534 = vmin.xlane.f32.xlu0 %v1533
        %v1535 = vpop.xlane.xlu0 %1534
        %v1536 = vcvt.f32.s32 %v1535
        %v1537 = vcvt.f32.s32 %v1531
        %v1538 = vshll.u32 %v1537, 16
        %v1539 = vadd.s32 %v1538, %v1536
        %v1540 = vand.u32 %v1274, 65535
        %v1541 = vshra.s32 %v1274, 16
        %v1542 = vcvt.s32.f32 %v1540
        %v1543 = vcvt.s32.f32 %v1541
        %1544 = vmin.xlane.f32.xlu0 %v1543
        %v1545 = vpop.xlane.xlu0 %1544
        %vm1546 = vcmp.eq.f32.partialorder %v1543, %v1545
        %v1547 = vsel %vm1546, %v1542, inf
        %1548 = vmin.xlane.f32.xlu0 %v1547
        %v1549 = vpop.xlane.xlu0 %1548
        %v1550 = vcvt.f32.s32 %v1549
        %v1551 = vcvt.f32.s32 %v1545
        %v1552 = vshll.u32 %v1551, 16
        %v1553 = vadd.s32 %v1552, %v1550
        %v1554 = vand.u32 %v1275, 65535
        %v1555 = vshra.s32 %v1275, 16
        %v1556 = vcvt.s32.f32 %v1554
        %v1557 = vcvt.s32.f32 %v1555
        %1558 = vmin.xlane.f32.xlu0 %v1557
        %v1559 = vpop.xlane.xlu0 %1558
        %vm1560 = vcmp.eq.f32.partialorder %v1557, %v1559
        %v1561 = vsel %vm1560, %v1556, inf
        %1562 = vmin.xlane.f32.xlu0 %v1561
        %v1563 = vpop.xlane.xlu0 %1562
        %v1564 = vcvt.f32.s32 %v1563
        %v1565 = vcvt.f32.s32 %v1559
        %v1566 = vshll.u32 %v1565, 16
        %v1567 = vadd.s32 %v1566, %v1564
        %v1568 = vand.u32 %v1276, 65535
        %v1569 = vshra.s32 %v1276, 16
        %v1570 = vcvt.s32.f32 %v1568
        %v1571 = vcvt.s32.f32 %v1569
        %1572 = vmin.xlane.f32.xlu0 %v1571
        %v1573 = vpop.xlane.xlu0 %1572
        %vm1574 = vcmp.eq.f32.partialorder %v1571, %v1573
        %v1575 = vsel %vm1574, %v1570, inf
        %1576 = vmin.xlane.f32.xlu0 %v1575
        %v1577 = vpop.xlane.xlu0 %1576
        %v1578 = vcvt.f32.s32 %v1577
        %v1579 = vcvt.f32.s32 %v1573
        %v1580 = vshll.u32 %v1579, 16
        %v1581 = vadd.s32 %v1580, %v1578
        %v1582 = vand.u32 %v1277, 65535
        %v1583 = vshra.s32 %v1277, 16
        %v1584 = vcvt.s32.f32 %v1582
        %v1585 = vcvt.s32.f32 %v1583
        %1586 = vmin.xlane.f32.xlu0 %v1585
        %v1587 = vpop.xlane.xlu0 %1586
        %vm1588 = vcmp.eq.f32.partialorder %v1585, %v1587
        %v1589 = vsel %vm1588, %v1584, inf
        %1590 = vmin.xlane.f32.xlu0 %v1589
        %v1591 = vpop.xlane.xlu0 %1590
        %v1592 = vcvt.f32.s32 %v1591
        %v1593 = vcvt.f32.s32 %v1587
        %v1594 = vshll.u32 %v1593, 16
        %v1595 = vadd.s32 %v1594, %v1592
        %v1596 = vand.u32 %v1278, 65535
        %v1597 = vshra.s32 %v1278, 16
        %v1598 = vcvt.s32.f32 %v1596
        %v1599 = vcvt.s32.f32 %v1597
        %1600 = vmin.xlane.f32.xlu0 %v1599
        %v1601 = vpop.xlane.xlu0 %1600
        %vm1602 = vcmp.eq.f32.partialorder %v1599, %v1601
        %v1603 = vsel %vm1602, %v1598, inf
        %1604 = vmin.xlane.f32.xlu0 %v1603
        %v1605 = vpop.xlane.xlu0 %1604
        %v1606 = vcvt.f32.s32 %v1605
        %v1607 = vcvt.f32.s32 %v1601
        %v1608 = vshll.u32 %v1607, 16
        %v1609 = vadd.s32 %v1608, %v1606
        %v1610 = vand.u32 %v1279, 65535
        %v1611 = vshra.s32 %v1279, 16
        %v1612 = vcvt.s32.f32 %v1610
        %v1613 = vcvt.s32.f32 %v1611
        %1614 = vmin.xlane.f32.xlu0 %v1613
        %v1615 = vpop.xlane.xlu0 %1614
        %vm1616 = vcmp.eq.f32.partialorder %v1613, %v1615
        %v1617 = vsel %vm1616, %v1612, inf
        %1618 = vmin.xlane.f32.xlu0 %v1617
        %v1619 = vpop.xlane.xlu0 %1618
        %v1620 = vcvt.f32.s32 %v1619
        %v1621 = vcvt.f32.s32 %v1615
        %v1622 = vshll.u32 %v1621, 16
        %v1623 = vadd.s32 %v1622, %v1620
        %v1624 = vand.u32 %v1280, 65535
        %v1625 = vshra.s32 %v1280, 16
        %v1626 = vcvt.s32.f32 %v1624
        %v1627 = vcvt.s32.f32 %v1625
        %1628 = vmin.xlane.f32.xlu0 %v1627
        %v1629 = vpop.xlane.xlu0 %1628
        %vm1630 = vcmp.eq.f32.partialorder %v1627, %v1629
        %v1631 = vsel %vm1630, %v1626, inf
        %1632 = vmin.xlane.f32.xlu0 %v1631
        %v1633 = vpop.xlane.xlu0 %1632
        %v1634 = vcvt.f32.s32 %v1633
        %v1635 = vcvt.f32.s32 %v1629
        %v1636 = vshll.u32 %v1635, 16
        %v1637 = vadd.s32 %v1636, %v1634
        %v1638 = vand.u32 %v1281, 65535
        %v1639 = vshra.s32 %v1281, 16
        %v1640 = vcvt.s32.f32 %v1638
        %v1641 = vcvt.s32.f32 %v1639
        %1642 = vmin.xlane.f32.xlu0 %v1641
        %v1643 = vpop.xlane.xlu0 %1642
        %vm1644 = vcmp.eq.f32.partialorder %v1641, %v1643
        %v1645 = vsel %vm1644, %v1640, inf
        %1646 = vmin.xlane.f32.xlu0 %v1645
        %v1647 = vpop.xlane.xlu0 %1646
        %v1648 = vcvt.f32.s32 %v1647
        %v1649 = vcvt.f32.s32 %v1643
        %v1650 = vshll.u32 %v1649, 16
        %v1651 = vadd.s32 %v1650, %v1648
        %v1652 = vand.u32 %v1282, 65535
        %v1653 = vshra.s32 %v1282, 16
        %v1654 = vcvt.s32.f32 %v1652
        %v1655 = vcvt.s32.f32 %v1653
        %1656 = vmin.xlane.f32.xlu0 %v1655
        %v1657 = vpop.xlane.xlu0 %1656
        %vm1658 = vcmp.eq.f32.partialorder %v1655, %v1657
        %v1659 = vsel %vm1658, %v1654, inf
        %1660 = vmin.xlane.f32.xlu0 %v1659
        %v1661 = vpop.xlane.xlu0 %1660
        %v1662 = vcvt.f32.s32 %v1661
        %v1663 = vcvt.f32.s32 %v1657
        %v1664 = vshll.u32 %v1663, 16
        %v1665 = vadd.s32 %v1664, %v1662
        %v1666 = vand.u32 %v1283, 65535
        %v1667 = vshra.s32 %v1283, 16
        %v1668 = vcvt.s32.f32 %v1666
        %v1669 = vcvt.s32.f32 %v1667
        %1670 = vmin.xlane.f32.xlu0 %v1669
        %v1671 = vpop.xlane.xlu0 %1670
        %vm1672 = vcmp.eq.f32.partialorder %v1669, %v1671
        %v1673 = vsel %vm1672, %v1668, inf
        %1674 = vmin.xlane.f32.xlu0 %v1673
        %v1675 = vpop.xlane.xlu0 %1674
        %v1676 = vcvt.f32.s32 %v1675
        %v1677 = vcvt.f32.s32 %v1671
        %v1678 = vshll.u32 %v1677, 16
        %v1679 = vadd.s32 %v1678, %v1676
        %v1680 = vand.u32 %v1284, 65535
        %v1681 = vshra.s32 %v1284, 16
        %v1682 = vcvt.s32.f32 %v1680
        %v1683 = vcvt.s32.f32 %v1681
        %1684 = vmin.xlane.f32.xlu0 %v1683
        %v1685 = vpop.xlane.xlu0 %1684
        %vm1686 = vcmp.eq.f32.partialorder %v1683, %v1685
        %v1687 = vsel %vm1686, %v1682, inf
        %1688 = vmin.xlane.f32.xlu0 %v1687
        %v1689 = vpop.xlane.xlu0 %1688
        %v1690 = vcvt.f32.s32 %v1689
        %v1691 = vcvt.f32.s32 %v1685
        %v1692 = vshll.u32 %v1691, 16
        %v1693 = vadd.s32 %v1692, %v1690
        %v1694 = vand.u32 %v1285, 65535
        %v1695 = vshra.s32 %v1285, 16
        %v1696 = vcvt.s32.f32 %v1694
        %v1697 = vcvt.s32.f32 %v1695
        %1698 = vmin.xlane.f32.xlu0 %v1697
        %v1699 = vpop.xlane.xlu0 %1698
        %vm1700 = vcmp.eq.f32.partialorder %v1697, %v1699
        %v1701 = vsel %vm1700, %v1696, inf
        %1702 = vmin.xlane.f32.xlu0 %v1701
        %v1703 = vpop.xlane.xlu0 %1702
        %v1704 = vcvt.f32.s32 %v1703
        %v1705 = vcvt.f32.s32 %v1699
        %v1706 = vshll.u32 %v1705, 16
        %v1707 = vadd.s32 %v1706, %v1704
        %v1708 = vand.u32 %v1286, 65535
        %v1709 = vshra.s32 %v1286, 16
        %v1710 = vcvt.s32.f32 %v1708
        %v1711 = vcvt.s32.f32 %v1709
        %1712 = vmin.xlane.f32.xlu0 %v1711
        %v1713 = vpop.xlane.xlu0 %1712
        %vm1714 = vcmp.eq.f32.partialorder %v1711, %v1713
        %v1715 = vsel %vm1714, %v1710, inf
        %1716 = vmin.xlane.f32.xlu0 %v1715
        %v1717 = vpop.xlane.xlu0 %1716
        %v1718 = vcvt.f32.s32 %v1717
        %v1719 = vcvt.f32.s32 %v1713
        %v1720 = vshll.u32 %v1719, 16
        %v1721 = vadd.s32 %v1720, %v1718
        %v1722 = vand.u32 %v1287, 65535
        %v1723 = vshra.s32 %v1287, 16
        %v1724 = vcvt.s32.f32 %v1722
        %v1725 = vcvt.s32.f32 %v1723
        %1726 = vmin.xlane.f32.xlu0 %v1725
        %v1727 = vpop.xlane.xlu0 %1726
        %vm1728 = vcmp.eq.f32.partialorder %v1725, %v1727
        %v1729 = vsel %vm1728, %v1724, inf
        %1730 = vmin.xlane.f32.xlu0 %v1729
        %v1731 = vpop.xlane.xlu0 %1730
        %v1732 = vcvt.f32.s32 %v1731
        %v1733 = vcvt.f32.s32 %v1727
        %v1734 = vshll.u32 %v1733, 16
        %v1735 = vadd.s32 %v1734, %v1732
        %v1736 = vsub.f32 %v1161, %v521
        %v1737 = vsub.f32 %v1163, %v523
        %v1738 = vsub.f32 %v1165, %v525
        %v1739 = vsub.f32 %v1167, %v527
        %v1740 = vsub.f32 %v1169, %v529
        %v1741 = vsub.f32 %v1171, %v531
        %v1742 = vsub.f32 %v1173, %v533
        %v1743 = vsub.f32 %v1175, %v535
        %v1744 = vsub.f32 %v1177, %v537
        %v1745 = vsub.f32 %v1179, %v539
        %v1746 = vsub.f32 %v1181, %v541
        %v1747 = vsub.f32 %v1183, %v543
        %v1748 = vsub.f32 %v1185, %v545
        %v1749 = vsub.f32 %v1187, %v547
        %v1750 = vsub.f32 %v1189, %v549
        %v1751 = vsub.f32 %v1191, %v551
        %v1752 = vsub.f32 %v1193, %v553
        %v1753 = vsub.f32 %v1195, %v555
        %v1754 = vsub.f32 %v1197, %v557
        %v1755 = vsub.f32 %v1199, %v559
        %v1756 = vsub.f32 %v1201, %v561
        %v1757 = vsub.f32 %v1203, %v563
        %v1758 = vsub.f32 %v1205, %v565
        %v1759 = vsub.f32 %v1207, %v567
        %v1760 = vsub.f32 %v1209, %v569
        %v1761 = vsub.f32 %v1211, %v571
        %v1762 = vsub.f32 %v1213, %v573
        %v1763 = vsub.f32 %v1215, %v575
        %v1764 = vsub.f32 %v1217, %v577
        %v1765 = vsub.f32 %v1219, %v579
        %v1766 = vsub.f32 %v1221, %v581
        %v1767 = vsub.f32 %v1223, %v583
        %v1768 = vmul.f32 %v1736, 1.442695
        %v1769 = vpow.pop %v1768
        %v1770 = vmul.f32 %v1737, 1.442695
        %v1771 = vpow.pop %v1770
        %v1772 = vmul.f32 %v1738, 1.442695
        %v1773 = vpow.pop %v1772
        %v1774 = vmul.f32 %v1739, 1.442695
        %v1775 = vpow.pop %v1774
        %v1776 = vmul.f32 %v1740, 1.442695
        %v1777 = vpow.pop %v1776
        %v1778 = vmul.f32 %v1741, 1.442695
        %v1779 = vpow.pop %v1778
        %v1780 = vmul.f32 %v1742, 1.442695
        %v1781 = vpow.pop %v1780
        %v1782 = vmul.f32 %v1743, 1.442695
        %v1783 = vpow.pop %v1782
        %v1784 = vmul.f32 %v1744, 1.442695
        %v1785 = vpow.pop %v1784
        %v1786 = vmul.f32 %v1745, 1.442695
        %v1787 = vpow.pop %v1786
        %v1788 = vmul.f32 %v1746, 1.442695
        %v1789 = vpow.pop %v1788
        %v1790 = vmul.f32 %v1747, 1.442695
        %v1791 = vpow.pop %v1790
        %v1792 = vmul.f32 %v1748, 1.442695
        %v1793 = vpow.pop %v1792
        %v1794 = vmul.f32 %v1749, 1.442695
        %v1795 = vpow.pop %v1794
        %v1796 = vmul.f32 %v1750, 1.442695
        %v1797 = vpow.pop %v1796
        %v1798 = vmul.f32 %v1751, 1.442695
        %v1799 = vpow.pop %v1798
        %v1800 = vmul.f32 %v1752, 1.442695
        %v1801 = vpow.pop %v1800
        %v1802 = vmul.f32 %v1753, 1.442695
        %v1803 = vpow.pop %v1802
        %v1804 = vmul.f32 %v1754, 1.442695
        %v1805 = vpow.pop %v1804
        %v1806 = vmul.f32 %v1755, 1.442695
        %v1807 = vpow.pop %v1806
        %v1808 = vmul.f32 %v1756, 1.442695
        %v1809 = vpow.pop %v1808
        %v1810 = vmul.f32 %v1757, 1.442695
        %v1811 = vpow.pop %v1810
        %v1812 = vmul.f32 %v1758, 1.442695
        %v1813 = vpow.pop %v1812
        %v1814 = vmul.f32 %v1759, 1.442695
        %v1815 = vpow.pop %v1814
        %v1816 = vmul.f32 %v1760, 1.442695
        %v1817 = vpow.pop %v1816
        %v1818 = vmul.f32 %v1761, 1.442695
        %v1819 = vpow.pop %v1818
        %v1820 = vmul.f32 %v1762, 1.442695
        %v1821 = vpow.pop %v1820
        %v1822 = vmul.f32 %v1763, 1.442695
        %v1823 = vpow.pop %v1822
        %v1824 = vmul.f32 %v1764, 1.442695
        %v1825 = vpow.pop %v1824
        %v1826 = vmul.f32 %v1765, 1.442695
        %v1827 = vpow.pop %v1826
        %v1828 = vmul.f32 %v1766, 1.442695
        %v1829 = vpow.pop %v1828
        %v1830 = vmul.f32 %v1767, 1.442695
        %v1831 = vpow.pop %v1830
        %v1832 = vadd.f32 %v1769, 1.0
        %v1833 = vadd.f32 %v1771, 1.0
        %v1834 = vadd.f32 %v1773, 1.0
        %v1835 = vadd.f32 %v1775, 1.0
        %v1836 = vadd.f32 %v1777, 1.0
        %v1837 = vadd.f32 %v1779, 1.0
        %v1838 = vadd.f32 %v1781, 1.0
        %v1839 = vadd.f32 %v1783, 1.0
        %v1840 = vadd.f32 %v1785, 1.0
        %v1841 = vadd.f32 %v1787, 1.0
        %v1842 = vadd.f32 %v1789, 1.0
        %v1843 = vadd.f32 %v1791, 1.0
        %v1844 = vadd.f32 %v1793, 1.0
        %v1845 = vadd.f32 %v1795, 1.0
        %v1846 = vadd.f32 %v1797, 1.0
        %v1847 = vadd.f32 %v1799, 1.0
        %v1848 = vadd.f32 %v1801, 1.0
        %v1849 = vadd.f32 %v1803, 1.0
        %v1850 = vadd.f32 %v1805, 1.0
        %v1851 = vadd.f32 %v1807, 1.0
        %v1852 = vadd.f32 %v1809, 1.0
        %v1853 = vadd.f32 %v1811, 1.0
        %v1854 = vadd.f32 %v1813, 1.0
        %v1855 = vadd.f32 %v1815, 1.0
        %v1856 = vadd.f32 %v1817, 1.0
        %v1857 = vadd.f32 %v1819, 1.0
        %v1858 = vadd.f32 %v1821, 1.0
        %v1859 = vadd.f32 %v1823, 1.0
        %v1860 = vadd.f32 %v1825, 1.0
        %v1861 = vadd.f32 %v1827, 1.0
        %v1862 = vadd.f32 %v1829, 1.0
        %v1863 = vadd.f32 %v1831, 1.0
        %v1864 = vrcp.pop %v1832
        %v1865 = vrcp.pop %v1833
        %v1866 = vrcp.pop %v1834
        %v1867 = vrcp.pop %v1835
        %v1868 = vrcp.pop %v1836
        %v1869 = vrcp.pop %v1837
        %v1870 = vrcp.pop %v1838
        %v1871 = vrcp.pop %v1839
        %v1872 = vrcp.pop %v1840
        %v1873 = vrcp.pop %v1841
        %v1874 = vrcp.pop %v1842
        %v1875 = vrcp.pop %v1843
        %v1876 = vrcp.pop %v1844
        %v1877 = vrcp.pop %v1845
        %v1878 = vrcp.pop %v1846
        %v1879 = vrcp.pop %v1847
        %v1880 = vrcp.pop %v1848
        %v1881 = vrcp.pop %v1849
        %v1882 = vrcp.pop %v1850
        %v1883 = vrcp.pop %v1851
        %v1884 = vrcp.pop %v1852
        %v1885 = vrcp.pop %v1853
        %v1886 = vrcp.pop %v1854
        %v1887 = vrcp.pop %v1855
        %v1888 = vrcp.pop %v1856
        %v1889 = vrcp.pop %v1857
        %v1890 = vrcp.pop %v1858
        %v1891 = vrcp.pop %v1859
        %v1892 = vrcp.pop %v1860
        %v1893 = vrcp.pop %v1861
        %v1894 = vrcp.pop %v1862
        %v1895 = vrcp.pop %v1863
        %v1896 = vmul.f32 %v1769, %v1864
        %v1897 = vmul.f32 %v1771, %v1865
        %v1898 = vmul.f32 %v1773, %v1866
        %v1899 = vmul.f32 %v1775, %v1867
        %v1900 = vmul.f32 %v1777, %v1868
        %v1901 = vmul.f32 %v1779, %v1869
        %v1902 = vmul.f32 %v1781, %v1870
        %v1903 = vmul.f32 %v1783, %v1871
        %v1904 = vmul.f32 %v1785, %v1872
        %v1905 = vmul.f32 %v1787, %v1873
        %v1906 = vmul.f32 %v1789, %v1874
        %v1907 = vmul.f32 %v1791, %v1875
        %v1908 = vmul.f32 %v1793, %v1876
        %v1909 = vmul.f32 %v1795, %v1877
        %v1910 = vmul.f32 %v1797, %v1878
        %v1911 = vmul.f32 %v1799, %v1879
        %v1912 = vmul.f32 %v1801, %v1880
        %v1913 = vmul.f32 %v1803, %v1881
        %v1914 = vmul.f32 %v1805, %v1882
        %v1915 = vmul.f32 %v1807, %v1883
        %v1916 = vmul.f32 %v1809, %v1884
        %v1917 = vmul.f32 %v1811, %v1885
        %v1918 = vmul.f32 %v1813, %v1886
        %v1919 = vmul.f32 %v1815, %v1887
        %v1920 = vmul.f32 %v1817, %v1888
        %v1921 = vmul.f32 %v1819, %v1889
        %v1922 = vmul.f32 %v1821, %v1890
        %v1923 = vmul.f32 %v1823, %v1891
        %v1924 = vmul.f32 %v1825, %v1892
        %v1925 = vmul.f32 %v1827, %v1893
        %v1926 = vmul.f32 %v1829, %v1894
        %v1927 = vmul.f32 %v1831, %v1895
        %v1928 = vsel %vm1096, %v1864, 0.0
        %v1929 = vsel %vm1097, %v1865, 0.0
        %v1930 = vsel %vm1098, %v1866, 0.0
        %v1931 = vsel %vm1099, %v1867, 0.0
        %v1932 = vsel %vm1100, %v1868, 0.0
        %v1933 = vsel %vm1101, %v1869, 0.0
        %v1934 = vsel %vm1102, %v1870, 0.0
        %v1935 = vsel %vm1103, %v1871, 0.0
        %v1936 = vsel %vm1104, %v1872, 0.0
        %v1937 = vsel %vm1105, %v1873, 0.0
        %v1938 = vsel %vm1106, %v1874, 0.0
        %v1939 = vsel %vm1107, %v1875, 0.0
        %v1940 = vsel %vm1108, %v1876, 0.0
        %v1941 = vsel %vm1109, %v1877, 0.0
        %v1942 = vsel %vm1110, %v1878, 0.0
        %v1943 = vsel %vm1111, %v1879, 0.0
        %v1944 = vsel %vm1112, %v1880, 0.0
        %v1945 = vsel %vm1113, %v1881, 0.0
        %v1946 = vsel %vm1114, %v1882, 0.0
        %v1947 = vsel %vm1115, %v1883, 0.0
        %v1948 = vsel %vm1116, %v1884, 0.0
        %v1949 = vsel %vm1117, %v1885, 0.0
        %v1950 = vsel %vm1118, %v1886, 0.0
        %v1951 = vsel %vm1119, %v1887, 0.0
        %v1952 = vsel %vm1120, %v1888, 0.0
        %v1953 = vsel %vm1121, %v1889, 0.0
        %v1954 = vsel %vm1122, %v1890, 0.0
        %v1955 = vsel %vm1123, %v1891, 0.0
        %v1956 = vsel %vm1124, %v1892, 0.0
        %v1957 = vsel %vm1125, %v1893, 0.0
        %v1958 = vsel %vm1126, %v1894, 0.0
        %v1959 = vsel %vm1127, %v1895, 0.0
        %vm1960 = vcmp.eq.s32.totalorder %v519, %v1301
        %vm1961 = vcmp.eq.s32.totalorder %v519, %v1315
        %vm1962 = vcmp.eq.s32.totalorder %v519, %v1329
        %vm1963 = vcmp.eq.s32.totalorder %v519, %v1343
        %vm1964 = vcmp.eq.s32.totalorder %v519, %v1357
        %vm1965 = vcmp.eq.s32.totalorder %v519, %v1371
        %vm1966 = vcmp.eq.s32.totalorder %v519, %v1385
        %vm1967 = vcmp.eq.s32.totalorder %v519, %v1399
        %vm1968 = vcmp.eq.s32.totalorder %v519, %v1413
        %vm1969 = vcmp.eq.s32.totalorder %v519, %v1427
        %vm1970 = vcmp.eq.s32.totalorder %v519, %v1441
        %vm1971 = vcmp.eq.s32.totalorder %v519, %v1455
        %vm1972 = vcmp.eq.s32.totalorder %v519, %v1469
        %vm1973 = vcmp.eq.s32.totalorder %v519, %v1483
        %vm1974 = vcmp.eq.s32.totalorder %v519, %v1497
        %vm1975 = vcmp.eq.s32.totalorder %v519, %v1511
        %vm1976 = vcmp.eq.s32.totalorder %v519, %v1525
        %vm1977 = vcmp.eq.s32.totalorder %v519, %v1539
        %vm1978 = vcmp.eq.s32.totalorder %v519, %v1553
        %vm1979 = vcmp.eq.s32.totalorder %v519, %v1567
        %vm1980 = vcmp.eq.s32.totalorder %v519, %v1581
        %vm1981 = vcmp.eq.s32.totalorder %v519, %v1595
        %vm1982 = vcmp.eq.s32.totalorder %v519, %v1609
        %vm1983 = vcmp.eq.s32.totalorder %v519, %v1623
        %vm1984 = vcmp.eq.s32.totalorder %v519, %v1637
        %vm1985 = vcmp.eq.s32.totalorder %v519, %v1651
        %vm1986 = vcmp.eq.s32.totalorder %v519, %v1665
        %vm1987 = vcmp.eq.s32.totalorder %v519, %v1679
        %vm1988 = vcmp.eq.s32.totalorder %v519, %v1693
        %vm1989 = vcmp.eq.s32.totalorder %v519, %v1707
        %vm1990 = vcmp.eq.s32.totalorder %v519, %v1721
        %vm1991 = vcmp.eq.s32.totalorder %v519, %v1735
        %v1992 = vsel %vm1960, %v1896, 0.0
        %v1993 = vsel %vm1961, %v1897, 0.0
        %v1994 = vsel %vm1962, %v1898, 0.0
        %v1995 = vsel %vm1963, %v1899, 0.0
        %v1996 = vsel %vm1964, %v1900, 0.0
        %v1997 = vsel %vm1965, %v1901, 0.0
        %v1998 = vsel %vm1966, %v1902, 0.0
        %v1999 = vsel %vm1967, %v1903, 0.0
        %v2000 = vsel %vm1968, %v1904, 0.0
        %v2001 = vsel %vm1969, %v1905, 0.0
        %v2002 = vsel %vm1970, %v1906, 0.0
        %v2003 = vsel %vm1971, %v1907, 0.0
        %v2004 = vsel %vm1972, %v1908, 0.0
        %v2005 = vsel %vm1973, %v1909, 0.0
        %v2006 = vsel %vm1974, %v1910, 0.0
        %v2007 = vsel %vm1975, %v1911, 0.0
        %v2008 = vsel %vm1976, %v1912, 0.0
        %v2009 = vsel %vm1977, %v1913, 0.0
        %v2010 = vsel %vm1978, %v1914, 0.0
        %v2011 = vsel %vm1979, %v1915, 0.0
        %v2012 = vsel %vm1980, %v1916, 0.0
        %v2013 = vsel %vm1981, %v1917, 0.0
        %v2014 = vsel %vm1982, %v1918, 0.0
        %v2015 = vsel %vm1983, %v1919, 0.0
        %v2016 = vsel %vm1984, %v1920, 0.0
        %v2017 = vsel %vm1985, %v1921, 0.0
        %v2018 = vsel %vm1986, %v1922, 0.0
        %v2019 = vsel %vm1987, %v1923, 0.0
        %v2020 = vsel %vm1988, %v1924, 0.0
        %v2021 = vsel %vm1989, %v1925, 0.0
        %v2022 = vsel %vm1990, %v1926, 0.0
        %v2023 = vsel %vm1991, %v1927, 0.0
        %v2024 = vadd.f32 %v1928, %v1992
        %v2025 = vadd.f32 %v1929, %v1993
        %v2026 = vadd.f32 %v1930, %v1994
        %v2027 = vadd.f32 %v1931, %v1995
        %v2028 = vadd.f32 %v1932, %v1996
        %v2029 = vadd.f32 %v1933, %v1997
        %v2030 = vadd.f32 %v1934, %v1998
        %v2031 = vadd.f32 %v1935, %v1999
        %v2032 = vadd.f32 %v1936, %v2000
        %v2033 = vadd.f32 %v1937, %v2001
        %v2034 = vadd.f32 %v1938, %v2002
        %v2035 = vadd.f32 %v1939, %v2003
        %v2036 = vadd.f32 %v1940, %v2004
        %v2037 = vadd.f32 %v1941, %v2005
        %v2038 = vadd.f32 %v1942, %v2006
        %v2039 = vadd.f32 %v1943, %v2007
        %v2040 = vadd.f32 %v1944, %v2008
        %v2041 = vadd.f32 %v1945, %v2009
        %v2042 = vadd.f32 %v1946, %v2010
        %v2043 = vadd.f32 %v1947, %v2011
        %v2044 = vadd.f32 %v1948, %v2012
        %v2045 = vadd.f32 %v1949, %v2013
        %v2046 = vadd.f32 %v1950, %v2014
        %v2047 = vadd.f32 %v1951, %v2015
        %v2048 = vadd.f32 %v1952, %v2016
        %v2049 = vadd.f32 %v1953, %v2017
        %v2050 = vadd.f32 %v1954, %v2018
        %v2051 = vadd.f32 %v1955, %v2019
        %v2052 = vadd.f32 %v1956, %v2020
        %v2053 = vadd.f32 %v1957, %v2021
        %v2054 = vadd.f32 %v1958, %v2022
        %v2055 = vadd.f32 %v1959, %v2023
        %2056 = vst [vmem:[%s164] sm:$0xff] %v2024
        %2057 = vst [vmem:[%s164 + $0x8] sm:$0xff] %v2025
        %2058 = vst [vmem:[%s164 + $0x10] sm:$0xff] %v2026
        %2059 = vst [vmem:[%s164 + $0x18] sm:$0xff] %v2027
        %2060 = vst [vmem:[%s164 + $0x20] sm:$0xff] %v2028
        %2061 = vst [vmem:[%s164 + $0x28] sm:$0xff] %v2029
        %2062 = vst [vmem:[%s164 + $0x30] sm:$0xff] %v2030
        %2063 = vst [vmem:[%s164 + $0x38] sm:$0xff] %v2031
        %2064 = vst [vmem:[%s164 + $0x40] sm:$0xff] %v2032
        %2065 = vst [vmem:[%s164 + $0x48] sm:$0xff] %v2033
        %2066 = vst [vmem:[%s164 + $0x50] sm:$0xff] %v2034
        %2067 = vst [vmem:[%s164 + $0x58] sm:$0xff] %v2035
        %2068 = vst [vmem:[%s164 + $0x60] sm:$0xff] %v2036
        %2069 = vst [vmem:[%s164 + $0x68] sm:$0xff] %v2037
        %2070 = vst [vmem:[%s164 + $0x70] sm:$0xff] %v2038
        %2071 = vst [vmem:[%s164 + $0x78] sm:$0xff] %v2039
        %2072 = vst [vmem:[%s164 + $0x80] sm:$0xff] %v2040
        %2073 = vst [vmem:[%s164 + $0x88] sm:$0xff] %v2041
        %2074 = vst [vmem:[%s164 + $0x90] sm:$0xff] %v2042
        %2075 = vst [vmem:[%s164 + $0x98] sm:$0xff] %v2043
        %2076 = vst [vmem:[%s164 + $0xa0] sm:$0xff] %v2044
        %2077 = vst [vmem:[%s164 + $0xa8] sm:$0xff] %v2045
        %2078 = vst [vmem:[%s164 + $0xb0] sm:$0xff] %v2046
        %2079 = vst [vmem:[%s164 + $0xb8] sm:$0xff] %v2047
        %2080 = vst [vmem:[%s164 + $0xc0] sm:$0xff] %v2048
        %2081 = vst [vmem:[%s164 + $0xc8] sm:$0xff] %v2049
        %2082 = vst [vmem:[%s164 + $0xd0] sm:$0xff] %v2050
        %2083 = vst [vmem:[%s164 + $0xd8] sm:$0xff] %v2051
        %2084 = vst [vmem:[%s164 + $0xe0] sm:$0xff] %v2052
        %2085 = vst [vmem:[%s164 + $0xe8] sm:$0xff] %v2053
        %2086 = vst [vmem:[%s164 + $0xf0] sm:$0xff] %v2054
        %2087 = vst [vmem:[%s164 + $0xf8] sm:$0xff] %v2055
        %s2088 = sand.u32 %s93, 1
        %s2089 = scalar_lea.sflag [#allocation3], %s2088
        %s2090 = sand.u32 %s93, 1
        %s2091 = smul.addr %s2090, 256
        %s2092 = scalar_lea.vmem [#allocation2], %s2091
        // Predicated region
        $region33: #{tpu_custom_call.1} parent=31 // pred_check
          %p2093 = pneg %p103
        $region34: #{tpu_custom_call.1} parent=31 // pred_check_branch
          %2095 = sbr.rel (%p2093) target = $region36
        $region35: #{tpu_custom_call.1} parent=31 // pred_region
          %s2096 = smul.u32 32, %s17
          %s2098 = ssub.s32 4096, 4096
          %2099 = vsyncadd %s2089, %s2098
          %s2100 = smul.addr %s2096, 128
          %s2101 = scalar_lea.hbm %s3, %s2100
          %s2102 = sshll.u32 %s2092, 4
          %s2103 = int_to_ptr.vmem [resolvable:$true] %s2102
          %2108 = dma.vmem_to_hbm [thread:$0]  %s2103, 4096, %s2101, %s2089, 128, 128, 8
        $region36: #{tpu_custom_call.1} parent=31 // pred_fallthru
          _
      $region32: #{tpu_custom_call.1} parent=5 // pred_fallthru
        _
      %p2109 = scmp.le.s32.totalorder 2, %s12
      // Predicated region
      $region37: #{tpu_custom_call.1} parent=5 // pred_check
        %p2110 = pneg %p2109
      $region38: #{tpu_custom_call.1} parent=5 // pred_check_branch
        %2112 = sbr.rel (%p2110) target = $region40
      $region39: #{tpu_custom_call.1} parent=5 // pred_region
        %s2113 = ssub.s32 %s12, 2
        // Predicated region
        $region41: #{tpu_custom_call.1} parent=39 // pred_check
          %p2114 = pneg %p109
        $region42: #{tpu_custom_call.1} parent=39 // pred_check_branch
          %2116 = sbr.rel (%p2114) target = $region44
        $region43: #{tpu_custom_call.1} parent=39 // pred_region
          %s2117 = sand.u32 %s94, 1
          %s2118 = scalar_lea.sflag [#allocation3], %s2117
          %s2119 = sand.u32 %s94, 1
          %s2120 = smul.addr %s2119, 256
          %s2121 = scalar_lea.vmem [#allocation2], %s2120
          %2122 = dma.done %s2118, 4096
        $region44: #{tpu_custom_call.1} parent=39 // pred_fallthru
          _
      $region40: #{tpu_custom_call.1} parent=5 // pred_fallthru
        _
    $region6: #{tpu_custom_call.1} parent=1 // loop_footer
      %s16 = sadd.s32 1, %s12
    $region7: #{tpu_custom_call.1} parent=1 // loop_footer_branch
      %11 = sbr.rel target = $region3
    $region8: #{tpu_custom_call.1} parent=1 // loop_exit
      _
    %2123 = vsyncpa [#allocation3], 1
    %s2124 = scalar_lea.sflag [#allocation3], 1
    %2125 = vsyncpa %s2124, 1

</llo_original>
